<compile_context>
chip_gen: v7x
topology: tpu7x:2x2x1
jax: 0.10.0
libtpu: 0.0.40
codegen_flags: <defaults>
</compile_context>

<pallas_src>
import jax
import jax.numpy as jnp
from jax.experimental import pallas as pl
from jax.experimental.pallas import tpu as pltpu

# ---------------- model configuration ----------------
NUM_FEATURES = 8
NUM_HIDDEN = 32
NUM_CLASSES = 4
N_PATCHES = 8
BATCH = 2                        # graphs per block (one "data" batch)
N_NODES = 32
N_SUB = 48                       # len(subgraphs_nodes_mapper)
P_TOTAL = BATCH * N_PATCHES      # patches / clusters per block
E_MAX = 64                       # max coarse edges per block (padded with -1)

_APPROX_RECIP = True             # one reciprocal policy everywhere (EUP vrcp)

# ---------------- packed parameter slab layout ([160, 128] f32) ----------------
_H = NUM_HIDDEN
R_W1 = 0                               # [F, H]
R_W2 = R_W1 + NUM_FEATURES             # [H, H]
R_WQKV = R_W2 + _H                     # [H, 4H] = [Wpre | Wk | I(xs) | Wv]
R_WPOST = R_WQKV + _H                  # [H, H]
R_WC1 = R_WPOST + _H                   # [H, H//2]
R_WC2 = R_WC1 + _H                     # [H//2, C]
R_BIAS = R_WC2 + _H // 2               # rows: b1,b2,bqkv,bpost,bc1,bc2,[1/a 1/b]
SLAB_ROWS = ((R_BIAS + 8 + 7) // 8) * 8
SLAB_COLS = 128

# ---------------- packed per-block data slab layout ([112, 128] f32) ----------------
R_X = 0                                # [N_NODES, F]         at cols 0:F
R_IDX = 32                             # rows: mapper|batch|row (float ids, pad -1)
R_MASK = 40                            # [BATCH, P_TOTAL] pre-normalized readout weights
R_COLC = 48                            # coarse-edge col ids as a column [E_MAX, 1]
DATA_ROWS = R_COLC + E_MAX
DATA_COLS = 128
OUT_ROWS = 8                           # lane-dense (8,128) output block per grid step


# ---------------- bf16-operand MXU matmul helpers (f32 accumulate) ----------------
def _dotb(a, b, dims):
    return jax.lax.dot_general(a.astype(jnp.bfloat16), b.astype(jnp.bfloat16),
                               dims, preferred_element_type=jnp.float32)


def _mm(a, b):      # a @ b
    return _dotb(a, b, (((1,), (0,)), ((), ())))


def _mm_nt(a, b):   # a @ b.T
    return _dotb(a, b, (((1,), (1,)), ((), ())))


def _mm_tn(a, b):   # a.T @ b
    return _dotb(a, b, (((0,), (0,)), ((), ())))


def _cluster_gt_kernel(data_ref,   # VMEM [DATA_ROWS, 128]  per-block data slab
                       slab_ref,   # VMEM [SLAB_ROWS, 128]  resident parameter slab
                       out_ref):   # VMEM [OUT_ROWS, 128]   lane-dense output block
    H = NUM_HIDDEN

    # ---- parameter views (static slices of the resident slab) ----
    W1 = slab_ref[R_W1:R_W1 + NUM_FEATURES, 0:H]
    W2 = slab_ref[R_W2:R_W2 + H, 0:H]
    Wqkv = slab_ref[R_WQKV:R_WQKV + H, 0:4 * H]          # [Wpre | Wk | I | Wv]
    Wpost = slab_ref[R_WPOST:R_WPOST + H, 0:H]
    Wc1 = slab_ref[R_WC1:R_WC1 + H, 0:H // 2]
    Wc2 = slab_ref[R_WC2:R_WC2 + H // 2, 0:NUM_CLASSES]
    bias = slab_ref[R_BIAS:R_BIAS + 8, :]
    b1 = bias[0:1, 0:H]
    b2 = bias[1:2, 0:H]
    bqkv = bias[2:3, 0:4 * H]
    bpost = bias[3:4, 0:H]
    bc1 = bias[4:5, 0:H // 2]
    bc2 = bias[5:6, 0:NUM_CLASSES]
    sa2 = bias[6:7, 0:1]                                 # 1/alpha
    sb2 = bias[6:7, 1:2]                                 # 1/beta

    # ---- per-block data views ----
    x = data_ref[R_X:R_X + N_NODES, 0:NUM_FEATURES]
    mapper = data_ref[R_IDX + 0:R_IDX + 1, 0:N_SUB].astype(jnp.int32)   # [1, Ns]
    batchv = data_ref[R_IDX + 1:R_IDX + 2, 0:N_SUB].astype(jnp.int32)   # [1, Ns]
    rowv = data_ref[R_IDX + 2:R_IDX + 3, 0:E_MAX].astype(jnp.int32)     # [1, E]
    maskf = data_ref[R_MASK:R_MASK + BATCH, 0:P_TOTAL]                  # [B, P] pre-normalized
    colc = data_ref[R_COLC:R_COLC + E_MAX, 0:1].astype(jnp.int32)       # [E, 1]

    # ---- one-hot structural operators (iota compares; exact in bf16) ----
    GT = (jax.lax.broadcasted_iota(jnp.int32, (N_NODES, N_SUB), 0)
          == mapper).astype(jnp.float32)                 # gather:  xs = GT.T @ h
    A = (jax.lax.broadcasted_iota(jnp.int32, (P_TOTAL, N_SUB), 0)
         == batchv).astype(jnp.float32)                  # scatter-sum = A @ .
    RT = (jax.lax.broadcasted_iota(jnp.int32, (P_TOTAL, E_MAX), 0)
          == rowv).astype(jnp.float32)                   # RT[p,e] = 1[row[e]==p]
    CM = (colc == batchv).astype(jnp.float32)            # CM[e,s] = 1[col[e]==batch[s]]

    cnt = jnp.sum(A, axis=1, keepdims=True)              # sub-nodes per patch
    cnt_inv = pl.reciprocal(jnp.maximum(cnt, 1.0), approx=_APPROX_RECIP)

    # ---- input_transform: Linear -> ReLU -> (Dropout=id) -> Linear -> ReLU ----
    h = jnp.maximum(_mm(x, W1) + b1, 0.0)
    h = jnp.maximum(_mm(h, W2) + b2, 0.0)

    # ---- gather to sub-nodes, fused [q_pre | k | xs | v] projection ----
    xs = _mm_tn(GT, h)                                   # x[subgraphs_nodes_mapper]
    qkv = _mm(xs, Wqkv) + bqkv                           # [Ns, 4H]
    k = qkv[:, H:2 * H]
    v = qkv[:, 3 * H:4 * H]

    # ---- per-patch scatter of the contiguous [q_pre | k | xs] prefix ----
    scat = _mm(A, qkv[:, 0:3 * H])                       # [P, 3H]
    q_s = scat[:, 0:H]                                   # sum-scatter of q_pre
    k_s = scat[:, H:2 * H] * cnt_inv                     # mean-scatter of k
    resid = scat[:, 2 * H:3 * H] * cnt_inv               # mean-scatter of xs (residual)

    q_ker = jnp.maximum(_mm(q_s, Wpost) + bpost, 0.0)    # relu(post_deepset(.))
    k_ker = jnp.maximum(k, 0.0)
    k_s_ker = jnp.maximum(k_s, 0.0)

    # ---- linearized attention over the coarsened graph ----
    # combined key per sub-node n: (1/alpha)*Ks_ker[batch[n]] + (1/beta)*K_ker[n]
    ck = sa2 * _mm_tn(A, k_s_ker) + sb2 * k_ker          # [Ns, H]
    S = _mm_nt(q_ker, ck)                                # [P, Ns]
    # TODO(synk): Double_Level_{Message,Key}Prop_random_walk_wo_norm are external PyG
    # MessagePassing layers; modeled as plain add-aggregation over the coarse edge list
    # (out[row] += in[col]).  Fused: Bmat[p,s] = #edges(p -> batch[s]) = RT @ CM.
    Bmat = _mm(RT, CM)                                   # [P, Ns]
    wmat = Bmat * S
    h_att = _mm(wmat, v)                                 # einsum('ni,nij->nj', q, M_prop)
    c_den = jnp.sum(wmat, axis=-1, keepdims=True) + 1e-6
    out = h_att * pl.reciprocal(c_den, approx=_APPROX_RECIP) + resid   # + residual 'sum'

    # ---- masked mean readout (block-diag mask pre-normalized wrapper-side) ----
    pooled = _mm(maskf, out)                             # [B, H]

    # ---- classifier: Linear -> ReLU -> (Dropout=id) -> Linear, then log_softmax ----
    hc = jnp.maximum(_mm(pooled, Wc1) + bc1, 0.0)
    logits = _mm(hc, Wc2) + bc2
    m = jnp.max(logits, axis=-1, keepdims=True)
    lse = m + jnp.log(jnp.sum(jnp.exp(logits - m), axis=-1, keepdims=True))

    out_ref[...] = jnp.zeros_like(out_ref)               # lane-dense (8,128) writeback block
    out_ref[0:BATCH, 0:NUM_CLASSES] = logits - lse


def pack_params(params):
    """One-time packing of all weights/biases (+ 1/alpha, 1/beta) into one slab."""
    H = NUM_HIDDEN
    Wqkv = jnp.concatenate([params["Wpre"], params["Wk"],
                            jnp.eye(H, dtype=jnp.float32), params["Wv"]], axis=1)
    bqkv = jnp.concatenate([params["bpre"], params["bk"],
                            jnp.zeros((1, H), jnp.float32), params["bv"]], axis=1)
    # alpha_beta -> softmax -> (pow(-0.5))^2 == 1/alpha, 1/beta
    ab = jax.nn.softmax(params["alpha_beta"])
    sab = jnp.stack([1.0 / ab[0], 1.0 / ab[1]])[None, :].astype(jnp.float32)

    slab = jnp.zeros((SLAB_ROWS, SLAB_COLS), jnp.float32)

    def put(s, r, a):
        return jax.lax.dynamic_update_slice(s, a.astype(jnp.float32), (r, 0))

    slab = put(slab, R_W1, params["W1"])
    slab = put(slab, R_W2, params["W2"])
    slab = put(slab, R_WQKV, Wqkv)
    slab = put(slab, R_WPOST, params["Wpost"])
    slab = put(slab, R_WC1, params["Wc1"])
    slab = put(slab, R_WC2, params["Wc2"])
    slab = put(slab, R_BIAS + 0, params["b1"])
    slab = put(slab, R_BIAS + 1, params["b2"])
    slab = put(slab, R_BIAS + 2, bqkv)
    slab = put(slab, R_BIAS + 3, params["bpost"])
    slab = put(slab, R_BIAS + 4, params["bc1"])
    slab = put(slab, R_BIAS + 5, params["bc2"])
    slab = put(slab, R_BIAS + 6, sab)
    return slab


def pack_data(data):
    """Pack one graph-block (BATCH graphs) into a lane-dense [DATA_ROWS, 128] f32 slab."""
    x = data["x"].astype(jnp.float32)
    mapper = data["subgraphs_nodes_mapper"]
    batch = data["subgraphs_batch"]
    row = data["subgraphs_batch_row"]
    col = data["subgraphs_batch_col"]
    mask = data["mask"].astype(jnp.float32)

    assert x.shape == (N_NODES, NUM_FEATURES)
    assert mapper.shape[0] <= N_SUB <= 128 and batch.shape[0] == mapper.shape[0]
    assert row.shape[0] <= E_MAX and col.shape[0] == row.shape[0]

    # readout mask -> block-diagonal [B, P_TOTAL], pre-normalized by per-graph patch count
    maskf = (jnp.eye(BATCH, dtype=jnp.float32)[:, :, None]
             * mask[:, None, :]).reshape(BATCH, P_TOTAL)
    maskf = maskf / jnp.maximum(maskf.sum(-1, keepdims=True), 1.0)

    slab = jnp.full((DATA_ROWS, DATA_COLS), -1.0, jnp.float32)   # -1 = index padding

    def put(s, r, c, a):
        return jax.lax.dynamic_update_slice(s, a.astype(jnp.float32), (r, c))

    slab = put(slab, R_X, 0, x)
    slab = put(slab, R_IDX + 0, 0, mapper[None, :])
    slab = put(slab, R_IDX + 1, 0, batch[None, :])
    slab = put(slab, R_IDX + 2, 0, row[None, :])
    slab = put(slab, R_MASK, 0, maskf)
    slab = put(slab, R_COLC, 0, col[:, None])
    return slab


def cluster_gt_forward(data_slabs, param_slab):
    """data_slabs: [num_blocks*DATA_ROWS, 128] -> log-probs [num_blocks, BATCH, C]."""
    num_blocks = data_slabs.shape[0] // DATA_ROWS
    out = pl.pallas_call(
        _cluster_gt_kernel,
        out_shape=jax.ShapeDtypeStruct((num_blocks * OUT_ROWS, 128), jnp.float32),
        grid=(num_blocks,),
        in_specs=[
            pl.BlockSpec((DATA_ROWS, DATA_COLS), lambda g: (g, 0)),   # per-block data slab
            pl.BlockSpec((SLAB_ROWS, SLAB_COLS), lambda g: (0, 0)),   # resident param slab
        ],
        out_specs=pl.BlockSpec((OUT_ROWS, 128), lambda g: (g, 0)),
        compiler_params=pltpu.CompilerParams(
            dimension_semantics=("parallel",)),
    )(data_slabs, param_slab)
    return out.reshape(num_blocks, OUT_ROWS, 128)[:, :BATCH, :NUM_CLASSES]


def _linear(key, din, dout):
    kw, kb = jax.random.split(key)
    s = 1.0 / (din ** 0.5)
    W = jax.random.uniform(kw, (din, dout), jnp.float32, -s, s)
    b = jax.random.uniform(kb, (1, dout), jnp.float32, -s, s)
    return W, b


if __name__ == "__main__":
    NUM_BLOCKS = 4
    key = jax.random.PRNGKey(0)
    keys = jax.random.split(key, 12)

    params = {}
    params["W1"], params["b1"] = _linear(keys[0], NUM_FEATURES, NUM_HIDDEN)
    params["W2"], params["b2"] = _linear(keys[1], NUM_HIDDEN, NUM_HIDDEN)
    params["Wpre"], params["bpre"] = _linear(keys[2], NUM_HIDDEN, NUM_HIDDEN)
    params["Wpost"], params["bpost"] = _linear(keys[3], NUM_HIDDEN, NUM_HIDDEN)
    params["Wk"], params["bk"] = _linear(keys[4], NUM_HIDDEN, NUM_HIDDEN)
    params["Wv"], params["bv"] = _linear(keys[5], NUM_HIDDEN, NUM_HIDDEN)
    params["Wc1"], params["bc1"] = _linear(keys[6], NUM_HIDDEN, NUM_HIDDEN // 2)
    params["Wc2"], params["bc2"] = _linear(keys[7], NUM_HIDDEN // 2, NUM_CLASSES)
    params["alpha_beta"] = jax.random.normal(keys[8], (2,), jnp.float32)

    # shared synthetic graph structure: 3 sub-nodes per patch, per-graph ring + self-loops
    mapper = (jnp.arange(N_SUB, dtype=jnp.int32) * 7) % N_NODES
    batch = jnp.arange(N_SUB, dtype=jnp.int32) % P_TOTAL
    rows, cols = [], []
    for b in range(BATCH):
        base = b * N_PATCHES
        for pp in range(N_PATCHES):
            p = base + pp
            rows += [p, p, p]
            cols += [p, base + (pp + 1) % N_PATCHES, base + (pp - 1) % N_PATCHES]
    row = jnp.array(rows, jnp.int32)
    col = jnp.array(cols, jnp.int32)
    mask = jnp.ones((BATCH, N_PATCHES), jnp.float32).at[1, N_PATCHES - 1].set(0.0)

    # several independent graph-blocks processed by one gridded pallas_call
    xkeys = jax.random.split(keys[9], NUM_BLOCKS)
    blocks = []
    for g in range(NUM_BLOCKS):
        x = jax.random.normal(xkeys[g], (N_NODES, NUM_FEATURES), jnp.float32)
        blocks.append(pack_data(dict(
            x=x, subgraphs_nodes_mapper=mapper, subgraphs_batch=batch,
            subgraphs_batch_row=row, subgraphs_batch_col=col, mask=mask)))
    data_slabs = jnp.concatenate(blocks, axis=0)

    param_slab = pack_params(params)          # one-time parameter packing
    fwd = jax.jit(cluster_gt_forward)
    out = jax.block_until_ready(fwd(data_slabs, param_slab))
    assert out.shape == (NUM_BLOCKS, BATCH, NUM_CLASSES) and out.dtype == jnp.float32
    assert bool(jnp.all(jnp.isfinite(out)))
    print("KERNEL_OK")
</pallas_src>

<mosaic_0001>
module attributes {stable_mosaic.version = 11 : i64} {
  func.func @_cluster_gt_kernel(%arg0: i32, %arg1: memref<112x128xf32, #tpu.memory_space<vmem>>, %arg2: memref<160x128xf32, #tpu.memory_space<vmem>>, %arg3: memref<8x128xf32, #tpu.memory_space<vmem>>) attributes {dimension_semantics = [#tpu.dimension_semantics<parallel>], iteration_bounds = array<i64: 4>, scalar_prefetch = 0 : i64, scratch_operands = 0 : i64, tpu.core_type = #tpu.core_type<tc>, window_params = [{transform_indices = @transform_0, window_bounds = array<i64: 112, 128>}, {pipeline_mode = #tpu.pipeline_mode<synchronous>, transform_indices = @transform_1, window_bounds = array<i64: 160, 128>}, {transform_indices = @transform_2, window_bounds = array<i64: 8, 128>}]} {
    %c0 = arith.constant 0 : index
    %c0_0 = arith.constant 0 : index
    %0 = vector.load %arg2[%c0, %c0_0] : memref<160x128xf32, #tpu.memory_space<vmem>>, vector<8x32xf32>
    %c8 = arith.constant 8 : index
    %c0_1 = arith.constant 0 : index
    %1 = vector.load %arg2[%c8, %c0_1] : memref<160x128xf32, #tpu.memory_space<vmem>>, vector<32x32xf32>
    %c40 = arith.constant 40 : index
    %c0_2 = arith.constant 0 : index
    %2 = vector.load %arg2[%c40, %c0_2] : memref<160x128xf32, #tpu.memory_space<vmem>>, vector<32x128xf32>
    %c72 = arith.constant 72 : index
    %c0_3 = arith.constant 0 : index
    %3 = vector.load %arg2[%c72, %c0_3] : memref<160x128xf32, #tpu.memory_space<vmem>>, vector<32x32xf32>
    %c104 = arith.constant 104 : index
    %c0_4 = arith.constant 0 : index
    %4 = vector.load %arg2[%c104, %c0_4] : memref<160x128xf32, #tpu.memory_space<vmem>>, vector<32x16xf32>
    %c136 = arith.constant 136 : index
    %c0_5 = arith.constant 0 : index
    %5 = vector.load %arg2[%c136, %c0_5] : memref<160x128xf32, #tpu.memory_space<vmem>>, vector<16x4xf32>
    %c152 = arith.constant 152 : index
    %c0_6 = arith.constant 0 : index
    %6 = vector.load %arg2[%c152, %c0_6] : memref<160x128xf32, #tpu.memory_space<vmem>>, vector<8x128xf32>
    %7 = vector.extract_strided_slice %6 {offsets = [0, 0], sizes = [1, 32], strides = [1, 1]} : vector<8x128xf32> to vector<1x32xf32>
    %8 = vector.extract_strided_slice %6 {offsets = [1, 0], sizes = [1, 32], strides = [1, 1]} : vector<8x128xf32> to vector<1x32xf32>
    %9 = vector.extract_strided_slice %6 {offsets = [2, 0], sizes = [1, 128], strides = [1, 1]} : vector<8x128xf32> to vector<1x128xf32>
    %10 = vector.extract_strided_slice %6 {offsets = [3, 0], sizes = [1, 32], strides = [1, 1]} : vector<8x128xf32> to vector<1x32xf32>
    %11 = vector.extract_strided_slice %6 {offsets = [4, 0], sizes = [1, 16], strides = [1, 1]} : vector<8x128xf32> to vector<1x16xf32>
    %12 = vector.extract_strided_slice %6 {offsets = [5, 0], sizes = [1, 4], strides = [1, 1]} : vector<8x128xf32> to vector<1x4xf32>
    %13 = vector.extract_strided_slice %6 {offsets = [6, 0], sizes = [1, 1], strides = [1, 1]} : vector<8x128xf32> to vector<1x1xf32>
    %14 = vector.extract_strided_slice %6 {offsets = [6, 1], sizes = [1, 1], strides = [1, 1]} : vector<8x128xf32> to vector<1x1xf32>
    %c0_7 = arith.constant 0 : index
    %c0_8 = arith.constant 0 : index
    %15 = vector.load %arg1[%c0_7, %c0_8] : memref<112x128xf32, #tpu.memory_space<vmem>>, vector<32x8xf32>
    %c32 = arith.constant 32 : index
    %c0_9 = arith.constant 0 : index
    %16 = vector.load %arg1[%c32, %c0_9] : memref<112x128xf32, #tpu.memory_space<vmem>>, vector<1x48xf32>
    %17 = arith.fptosi %16 : vector<1x48xf32> to vector<1x48xi32>
    %c33 = arith.constant 33 : index
    %c0_10 = arith.constant 0 : index
    %18 = vector.load %arg1[%c33, %c0_10] : memref<112x128xf32, #tpu.memory_space<vmem>>, vector<1x48xf32>
    %19 = arith.fptosi %18 : vector<1x48xf32> to vector<1x48xi32>
    %c34 = arith.constant 34 : index
    %c0_11 = arith.constant 0 : index
    %20 = vector.load %arg1[%c34, %c0_11] : memref<112x128xf32, #tpu.memory_space<vmem>>, vector<1x64xf32>
    %21 = arith.fptosi %20 : vector<1x64xf32> to vector<1x64xi32>
    %c40_12 = arith.constant 40 : index
    %c0_13 = arith.constant 0 : index
    %22 = vector.load %arg1[%c40_12, %c0_13] : memref<112x128xf32, #tpu.memory_space<vmem>>, vector<2x16xf32>
    %c48 = arith.constant 48 : index
    %c0_14 = arith.constant 0 : index
    %23 = vector.load %arg1[%c48, %c0_14] : memref<112x128xf32, #tpu.memory_space<vmem>>, vector<64x1xf32>
    %24 = arith.fptosi %23 : vector<64x1xf32> to vector<64x1xi32>
    %25 = tpu.iota {dimensions = array<i32: 0>} : vector<32x48xi32>
    %26 = vector.broadcast %17 : vector<1x48xi32> to vector<32x48xi32>
    %27 = arith.cmpi eq, %25, %26 : vector<32x48xi32>
    %28 = arith.extui %27 : vector<32x48xi1> to vector<32x48xi32>
    %29 = arith.sitofp %28 : vector<32x48xi32> to vector<32x48xf32>
    %30 = tpu.iota {dimensions = array<i32: 0>} : vector<16x48xi32>
    %31 = vector.broadcast %19 : vector<1x48xi32> to vector<16x48xi32>
    %32 = arith.cmpi eq, %30, %31 : vector<16x48xi32>
    %33 = arith.extui %32 : vector<16x48xi1> to vector<16x48xi32>
    %34 = arith.sitofp %33 : vector<16x48xi32> to vector<16x48xf32>
    %35 = tpu.iota {dimensions = array<i32: 0>} : vector<16x64xi32>
    %36 = vector.broadcast %21 : vector<1x64xi32> to vector<16x64xi32>
    %37 = arith.cmpi eq, %35, %36 : vector<16x64xi32>
    %38 = arith.extui %37 : vector<16x64xi1> to vector<16x64xi32>
    %39 = arith.sitofp %38 : vector<16x64xi32> to vector<16x64xf32>
    %40 = vector.broadcast %24 : vector<64x1xi32> to vector<64x48xi32>
    %41 = vector.broadcast %19 : vector<1x48xi32> to vector<64x48xi32>
    %42 = arith.cmpi eq, %40, %41 : vector<64x48xi32>
    %43 = arith.extui %42 : vector<64x48xi1> to vector<64x48xi32>
    %44 = arith.sitofp %43 : vector<64x48xi32> to vector<64x48xf32>
    %cst = arith.constant dense<0.000000e+00> : vector<16xf32>
    %45 = vector.multi_reduction <add>, %34, %cst [1] : vector<16x48xf32> to vector<16xf32>
    %46 = vector.shape_cast %45 : vector<16xf32> to vector<16x1xf32>
    %cst_15 = arith.constant 1.000000e+00 : f32
    %47 = vector.broadcast %cst_15 : f32 to vector<16x1xf32>
    %48 = arith.maximumf %46, %47 : vector<16x1xf32>
    %49 = tpu.reciprocal %48 {approx = true} : vector<16x1xf32> -> vector<16x1xf32>
    %50 = arith.truncf %15 : vector<32x8xf32> to vector<32x8xbf16>
    %51 = arith.truncf %0 : vector<8x32xf32> to vector<8x32xbf16>
    %cst_16 = arith.constant dense<0.000000e+00> : vector<32x32xf32>
    %52 = tpu.matmul %50, %51, %cst_16 {dimension_numbers = #tpu.dot_dimension_numbers<[1], [0], [0], [1], [0, 0, 1, 1], [], []>} : vector<32x8xbf16>, vector<8x32xbf16>, vector<32x32xf32> -> vector<32x32xf32>
    %53 = vector.broadcast %7 : vector<1x32xf32> to vector<32x32xf32>
    %54 = arith.addf %52, %53 : vector<32x32xf32>
    %cst_17 = arith.constant 0.000000e+00 : f32
    %55 = vector.broadcast %cst_17 : f32 to vector<32x32xf32>
    %56 = arith.maximumf %54, %55 : vector<32x32xf32>
    %57 = arith.truncf %56 : vector<32x32xf32> to vector<32x32xbf16>
    %58 = arith.truncf %1 : vector<32x32xf32> to vector<32x32xbf16>
    %cst_18 = arith.constant dense<0.000000e+00> : vector<32x32xf32>
    %59 = tpu.matmul %57, %58, %cst_18 {dimension_numbers = #tpu.dot_dimension_numbers<[1], [0], [0], [1], [0, 0, 1, 1], [], []>} : vector<32x32xbf16>, vector<32x32xbf16>, vector<32x32xf32> -> vector<32x32xf32>
    %60 = vector.broadcast %8 : vector<1x32xf32> to vector<32x32xf32>
    %61 = arith.addf %59, %60 : vector<32x32xf32>
    %cst_19 = arith.constant 0.000000e+00 : f32
    %62 = vector.broadcast %cst_19 : f32 to vector<32x32xf32>
    %63 = arith.maximumf %61, %62 : vector<32x32xf32>
    %64 = arith.truncf %29 : vector<32x48xf32> to vector<32x48xbf16>
    %65 = arith.truncf %63 : vector<32x32xf32> to vector<32x32xbf16>
    %cst_20 = arith.constant dense<0.000000e+00> : vector<48x32xf32>
    %66 = tpu.matmul %64, %65, %cst_20 {dimension_numbers = #tpu.dot_dimension_numbers<[0], [0], [1], [1], [0, 1, 1, 1], [], []>} : vector<32x48xbf16>, vector<32x32xbf16>, vector<48x32xf32> -> vector<48x32xf32>
    %67 = arith.truncf %66 : vector<48x32xf32> to vector<48x32xbf16>
    %68 = arith.truncf %2 : vector<32x128xf32> to vector<32x128xbf16>
    %cst_21 = arith.constant dense<0.000000e+00> : vector<48x128xf32>
    %69 = tpu.matmul %67, %68, %cst_21 {dimension_numbers = #tpu.dot_dimension_numbers<[1], [0], [0], [1], [0, 0, 1, 1], [], []>} : vector<48x32xbf16>, vector<32x128xbf16>, vector<48x128xf32> -> vector<48x128xf32>
    %70 = vector.broadcast %9 : vector<1x128xf32> to vector<48x128xf32>
    %71 = arith.addf %69, %70 : vector<48x128xf32>
    %72 = vector.extract_strided_slice %71 {offsets = [0, 32], sizes = [48, 32], strides = [1, 1]} : vector<48x128xf32> to vector<48x32xf32>
    %73 = vector.extract_strided_slice %71 {offsets = [0, 96], sizes = [48, 32], strides = [1, 1]} : vector<48x128xf32> to vector<48x32xf32>
    %74 = vector.extract_strided_slice %71 {offsets = [0, 0], sizes = [48, 96], strides = [1, 1]} : vector<48x128xf32> to vector<48x96xf32>
    %75 = arith.truncf %34 : vector<16x48xf32> to vector<16x48xbf16>
    %76 = arith.truncf %74 : vector<48x96xf32> to vector<48x96xbf16>
    %cst_22 = arith.constant dense<0.000000e+00> : vector<16x96xf32>
    %77 = tpu.matmul %75, %76, %cst_22 {dimension_numbers = #tpu.dot_dimension_numbers<[1], [0], [0], [1], [0, 0, 1, 1], [], []>} : vector<16x48xbf16>, vector<48x96xbf16>, vector<16x96xf32> -> vector<16x96xf32>
    %78 = vector.extract_strided_slice %77 {offsets = [0, 0], sizes = [16, 32], strides = [1, 1]} : vector<16x96xf32> to vector<16x32xf32>
    %79 = vector.extract_strided_slice %77 {offsets = [0, 32], sizes = [16, 32], strides = [1, 1]} : vector<16x96xf32> to vector<16x32xf32>
    %80 = vector.broadcast %49 : vector<16x1xf32> to vector<16x32xf32>
    %81 = arith.mulf %79, %80 : vector<16x32xf32>
    %82 = vector.extract_strided_slice %77 {offsets = [0, 64], sizes = [16, 32], strides = [1, 1]} : vector<16x96xf32> to vector<16x32xf32>
    %83 = vector.broadcast %49 : vector<16x1xf32> to vector<16x32xf32>
    %84 = arith.mulf %82, %83 : vector<16x32xf32>
    %85 = arith.truncf %78 : vector<16x32xf32> to vector<16x32xbf16>
    %86 = arith.truncf %3 : vector<32x32xf32> to vector<32x32xbf16>
    %cst_23 = arith.constant dense<0.000000e+00> : vector<16x32xf32>
    %87 = tpu.matmul %85, %86, %cst_23 {dimension_numbers = #tpu.dot_dimension_numbers<[1], [0], [0], [1], [0, 0, 1, 1], [], []>} : vector<16x32xbf16>, vector<32x32xbf16>, vector<16x32xf32> -> vector<16x32xf32>
    %88 = vector.broadcast %10 : vector<1x32xf32> to vector<16x32xf32>
    %89 = arith.addf %87, %88 : vector<16x32xf32>
    %cst_24 = arith.constant 0.000000e+00 : f32
    %90 = vector.broadcast %cst_24 : f32 to vector<16x32xf32>
    %91 = arith.maximumf %89, %90 : vector<16x32xf32>
    %cst_25 = arith.constant 0.000000e+00 : f32
    %92 = vector.broadcast %cst_25 : f32 to vector<48x32xf32>
    %93 = arith.maximumf %72, %92 : vector<48x32xf32>
    %cst_26 = arith.constant 0.000000e+00 : f32
    %94 = vector.broadcast %cst_26 : f32 to vector<16x32xf32>
    %95 = arith.maximumf %81, %94 : vector<16x32xf32>
    %96 = arith.truncf %34 : vector<16x48xf32> to vector<16x48xbf16>
    %97 = arith.truncf %95 : vector<16x32xf32> to vector<16x32xbf16>
    %cst_27 = arith.constant dense<0.000000e+00> : vector<48x32xf32>
    %98 = tpu.matmul %96, %97, %cst_27 {dimension_numbers = #tpu.dot_dimension_numbers<[0], [0], [1], [1], [0, 1, 1, 1], [], []>} : vector<16x48xbf16>, vector<16x32xbf16>, vector<48x32xf32> -> vector<48x32xf32>
    %99 = vector.broadcast %13 : vector<1x1xf32> to vector<48x32xf32>
    %100 = arith.mulf %99, %98 : vector<48x32xf32>
    %101 = vector.broadcast %14 : vector<1x1xf32> to vector<48x32xf32>
    %102 = arith.mulf %101, %93 : vector<48x32xf32>
    %103 = arith.addf %100, %102 : vector<48x32xf32>
    %104 = arith.truncf %91 : vector<16x32xf32> to vector<16x32xbf16>
    %105 = arith.truncf %103 : vector<48x32xf32> to vector<48x32xbf16>
    %cst_28 = arith.constant dense<0.000000e+00> : vector<16x48xf32>
    %106 = tpu.matmul %104, %105, %cst_28 {dimension_numbers = #tpu.dot_dimension_numbers<[1], [1], [0], [0], [0, 0, 1, 0], [], []>} : vector<16x32xbf16>, vector<48x32xbf16>, vector<16x48xf32> -> vector<16x48xf32>
    %107 = arith.truncf %39 : vector<16x64xf32> to vector<16x64xbf16>
    %108 = arith.truncf %44 : vector<64x48xf32> to vector<64x48xbf16>
    %cst_29 = arith.constant dense<0.000000e+00> : vector<16x48xf32>
    %109 = tpu.matmul %107, %108, %cst_29 {dimension_numbers = #tpu.dot_dimension_numbers<[1], [0], [0], [1], [0, 0, 1, 1], [], []>} : vector<16x64xbf16>, vector<64x48xbf16>, vector<16x48xf32> -> vector<16x48xf32>
    %110 = arith.mulf %109, %106 : vector<16x48xf32>
    %111 = arith.truncf %110 : vector<16x48xf32> to vector<16x48xbf16>
    %112 = arith.truncf %73 : vector<48x32xf32> to vector<48x32xbf16>
    %cst_30 = arith.constant dense<0.000000e+00> : vector<16x32xf32>
    %113 = tpu.matmul %111, %112, %cst_30 {dimension_numbers = #tpu.dot_dimension_numbers<[1], [0], [0], [1], [0, 0, 1, 1], [], []>} : vector<16x48xbf16>, vector<48x32xbf16>, vector<16x32xf32> -> vector<16x32xf32>
    %cst_31 = arith.constant dense<0.000000e+00> : vector<16xf32>
    %114 = vector.multi_reduction <add>, %110, %cst_31 [1] : vector<16x48xf32> to vector<16xf32>
    %115 = vector.shape_cast %114 : vector<16xf32> to vector<16x1xf32>
    %cst_32 = arith.constant 9.99999997E-7 : f32
    %116 = vector.broadcast %cst_32 : f32 to vector<16x1xf32>
    %117 = arith.addf %115, %116 : vector<16x1xf32>
    %118 = tpu.reciprocal %117 {approx = true} : vector<16x1xf32> -> vector<16x1xf32>
    %119 = vector.broadcast %118 : vector<16x1xf32> to vector<16x32xf32>
    %120 = arith.mulf %113, %119 : vector<16x32xf32>
    %121 = arith.addf %120, %84 : vector<16x32xf32>
    %122 = arith.truncf %22 : vector<2x16xf32> to vector<2x16xbf16>
    %123 = arith.truncf %121 : vector<16x32xf32> to vector<16x32xbf16>
    %cst_33 = arith.constant dense<0.000000e+00> : vector<2x32xf32>
    %124 = tpu.matmul %122, %123, %cst_33 {dimension_numbers = #tpu.dot_dimension_numbers<[1], [0], [0], [1], [0, 0, 1, 1], [], []>} : vector<2x16xbf16>, vector<16x32xbf16>, vector<2x32xf32> -> vector<2x32xf32>
    %125 = arith.truncf %124 : vector<2x32xf32> to vector<2x32xbf16>
    %126 = arith.truncf %4 : vector<32x16xf32> to vector<32x16xbf16>
    %cst_34 = arith.constant dense<0.000000e+00> : vector<2x16xf32>
    %127 = tpu.matmul %125, %126, %cst_34 {dimension_numbers = #tpu.dot_dimension_numbers<[1], [0], [0], [1], [0, 0, 1, 1], [], []>} : vector<2x32xbf16>, vector<32x16xbf16>, vector<2x16xf32> -> vector<2x16xf32>
    %128 = vector.broadcast %11 : vector<1x16xf32> to vector<2x16xf32>
    %129 = arith.addf %127, %128 : vector<2x16xf32>
    %cst_35 = arith.constant 0.000000e+00 : f32
    %130 = vector.broadcast %cst_35 : f32 to vector<2x16xf32>
    %131 = arith.maximumf %129, %130 : vector<2x16xf32>
    %132 = arith.truncf %131 : vector<2x16xf32> to vector<2x16xbf16>
    %133 = arith.truncf %5 : vector<16x4xf32> to vector<16x4xbf16>
    %cst_36 = arith.constant dense<0.000000e+00> : vector<2x4xf32>
    %134 = tpu.matmul %132, %133, %cst_36 {dimension_numbers = #tpu.dot_dimension_numbers<[1], [0], [0], [1], [0, 0, 1, 1], [], []>} : vector<2x16xbf16>, vector<16x4xbf16>, vector<2x4xf32> -> vector<2x4xf32>
    %135 = vector.broadcast %12 : vector<1x4xf32> to vector<2x4xf32>
    %136 = arith.addf %134, %135 : vector<2x4xf32>
    %cst_37 = arith.constant dense<0xFF800000> : vector<2xf32>
    %137 = vector.multi_reduction <maximumf>, %136, %cst_37 [1] : vector<2x4xf32> to vector<2xf32>
    %138 = vector.shape_cast %137 : vector<2xf32> to vector<2x1xf32>
    %139 = vector.broadcast %138 : vector<2x1xf32> to vector<2x4xf32>
    %140 = arith.subf %136, %139 : vector<2x4xf32>
    %141 = math.exp %140 : vector<2x4xf32>
    %cst_38 = arith.constant dense<0.000000e+00> : vector<2xf32>
    %142 = vector.multi_reduction <add>, %141, %cst_38 [1] : vector<2x4xf32> to vector<2xf32>
    %143 = vector.shape_cast %142 : vector<2xf32> to vector<2x1xf32>
    %144 = math.log %143 : vector<2x1xf32>
    %145 = arith.addf %138, %144 : vector<2x1xf32>
    %cst_39 = arith.constant 0.000000e+00 : f32
    %146 = vector.broadcast %cst_39 : f32 to vector<8x128xf32>
    %c0_40 = arith.constant 0 : index
    %c0_41 = arith.constant 0 : index
    %147 = vector.load %arg3[%c0_40, %c0_41] : memref<8x128xf32, #tpu.memory_space<vmem>>, vector<8x128xf32>
    tpu.vector_store %arg3[%c0_40, %c0_41], %146 {strides = array<i32>} : memref<8x128xf32, #tpu.memory_space<vmem>>, vector<8x128xf32>,
    %148 = vector.broadcast %145 : vector<2x1xf32> to vector<2x4xf32>
    %149 = arith.subf %136, %148 : vector<2x4xf32>
    %c0_42 = arith.constant 0 : index
    %c0_43 = arith.constant 0 : index
    %150 = vector.load %arg3[%c0_42, %c0_43] : memref<8x128xf32, #tpu.memory_space<vmem>>, vector<2x4xf32>
    tpu.vector_store %arg3[%c0_42, %c0_43], %149 {strides = array<i32>} : memref<8x128xf32, #tpu.memory_space<vmem>>, vector<2x4xf32>,
    return
  }
  func.func @transform_0(%arg0: i32) -> (i32, i32) {
    %c0_i32 = arith.constant 0 : i32
    %c0_i32_0 = arith.constant 0 : i32
    return %arg0, %c0_i32 : i32, i32
  }
  func.func @transform_1(%arg0: i32) -> (i32, i32) {
    %c0_i32 = arith.constant 0 : i32
    %c0_i32_0 = arith.constant 0 : i32
    %c0_i32_1 = arith.constant 0 : i32
    return %c0_i32, %c0_i32_0 : i32, i32
  }
  func.func @transform_2(%arg0: i32) -> (i32, i32) {
    %c0_i32 = arith.constant 0 : i32
    %c0_i32_0 = arith.constant 0 : i32
    return %arg0, %c0_i32 : i32, i32
  }
}

</mosaic_0001>

<llo_original>
// kernel: cluster_gt_forward.1
$region0: #{cluster_gt_forward.1}
  #allocation0 [shape = 'u32[]', space=smem, size = 0x4, offset = 0x4, fixed_abs, tag = 'smem constant byte address 0x4 - core index']
  #allocation1 [shape = 'u32[144,128]{1,0:T(1,128)}', space=vmem, size = 0x12000, scoped, tag = 'internal scratch']
  %s0 = inlined_call_operand.hbm [shape: f32[448,128], index: 0, kind: input, shape index: {}]
  %s1 = inlined_call_operand.hbm [shape: f32[160,128], index: 1, kind: input, shape index: {}]
  %s2 = inlined_call_operand.vmem [shape: f32[32,128], index: 2, kind: output, shape index: {}]
  %s3 = sld [smem:[#allocation0]]
  $region49: #{cluster_gt_forward.1} parent=0
    _
  %s5 = ssub.s32 1, %s3
  %s6 = scalar_select 0, %s5, %s3
  $region1: #{cluster_gt_forward.1} parent=0
    #allocation2 [shape = 'u8[114688]{0}', space=vmem, size = 0x1c000, scoped, tag = 'input window, operand 0']
    #allocation3 [shape = 's32[2]{0}', space=sflag, size = 0x8, scoped, tag = 'scoped memory for cluster_gt_forward.1']
    #allocation4 [shape = 'u8[81920]{0}', space=vmem, size = 0x14000, scoped, tag = 'input window, operand 1, single buffered']
    #allocation5 [shape = 's32[1]{0}', space=sflag, size = 0x4, scoped, tag = 'scoped memory for cluster_gt_forward.1']
    %7 = vsyncpa [#allocation3], 0
    %s8 = scalar_lea.sflag [#allocation3], 1
    %9 = vsyncpa %s8, 0
    %10 = vsyncpa [#allocation5], 0
    loop: start=0, step=1, limit=6
    $region2: #{cluster_gt_forward.1} parent=1 // loop_pre_header
      _
    $region3: #{cluster_gt_forward.1} parent=1 // loop_header
      %s12 = sphi 0, %s16
      %p13 = scmp.ge.s32.totalorder %s12, 6
      %s22 = sphi 0, %s24
      %s25 = sphi 0, %s22
      %s26 = sphi 0, %s25
      %s42 = sphi 0, %s26
      %s46 = sphi 0, %s46
      %s48 = sphi 0, %s46
      %s49 = sphi 0, %s48
      %s63 = sphi 0, %s49
      %s69 = sphi 0, %s71
      %s72 = sphi 0, %s69
      %s73 = sphi 0, %s72
      %s89 = sphi 0, %s73
    $region4: #{cluster_gt_forward.1} parent=1 // loop_header_branch
      %15 = sbr.rel (%p13) target = $region8
    $region5: #{cluster_gt_forward.1} parent=1 // loop_body
      %s17 = ssub.s32 %s12, 1
      %s18 = ssub.s32 %s12, 2
      %s19 = sadd.s32 %s12, 1
      %s20 = ssub.s32 %s12, %s19
      %p21 = scmp.eq.s32.totalorder %s20, 0
      %s23 = sadd.s32 %s22, 1
      %s24 = scalar_select %p21, %s22, %s23
      %p27 = pneg %p21
      %p28 = scmp.eq.s32.totalorder %s12, 3
      %p29 = por %p27, %p28
      %p30 = scmp.ne.s32.totalorder %s22, %s25
      %p31 = scmp.eq.s32.totalorder %s12, 0
      %p32 = por %p30, %p31
      %p33 = scmp.ne.s32.totalorder %s22, %s25
      %p34 = scmp.eq.s32.totalorder %s17, 3
      %p35 = por %p33, %p34
      %p36 = scmp.ne.s32.totalorder %s25, %s26
      %p37 = scmp.eq.s32.totalorder %s17, 0
      %p38 = por %p36, %p37
      %p39 = scmp.ne.s32.totalorder %s25, %s26
      %p40 = scmp.eq.s32.totalorder %s18, 3
      %p41 = por %p39, %p40
      %p43 = scmp.ne.s32.totalorder %s26, %s42
      %p44 = scmp.eq.s32.totalorder %s18, 0
      %p45 = por %p43, %p44
      %s47 = sadd.s32 %s46, 1
      %p50 = scmp.eq.s32.totalorder %s12, 3
      %p51 = scmp.ne.s32.totalorder %s46, %s48
      %p52 = scmp.eq.s32.totalorder %s12, 0
      %p53 = por %p51, %p52
      %p54 = scmp.ne.s32.totalorder %s46, %s48
      %p55 = scmp.eq.s32.totalorder %s17, 3
      %p56 = por %p54, %p55
      %p57 = scmp.ne.s32.totalorder %s48, %s49
      %p58 = scmp.eq.s32.totalorder %s17, 0
      %p59 = por %p57, %p58
      %p60 = scmp.ne.s32.totalorder %s48, %s49
      %p61 = scmp.eq.s32.totalorder %s18, 3
      %p62 = por %p60, %p61
      %p64 = scmp.ne.s32.totalorder %s49, %s63
      %p65 = scmp.eq.s32.totalorder %s18, 0
      %p66 = por %p64, %p65
      %s67 = ssub.s32 %s12, %s19
      %p68 = scmp.eq.s32.totalorder %s67, 0
      %s70 = sadd.s32 %s69, 1
      %s71 = scalar_select %p68, %s69, %s70
      %p74 = pneg %p68
      %p75 = scmp.eq.s32.totalorder %s12, 3
      %p76 = por %p74, %p75
      %p77 = scmp.ne.s32.totalorder %s69, %s72
      %p78 = scmp.eq.s32.totalorder %s12, 0
      %p79 = por %p77, %p78
      %p80 = scmp.ne.s32.totalorder %s69, %s72
      %p81 = scmp.eq.s32.totalorder %s17, 3
      %p82 = por %p80, %p81
      %p83 = scmp.ne.s32.totalorder %s72, %s73
      %p84 = scmp.eq.s32.totalorder %s17, 0
      %p85 = por %p83, %p84
      %p86 = scmp.ne.s32.totalorder %s72, %s73
      %p87 = scmp.eq.s32.totalorder %s18, 3
      %p88 = por %p86, %p87
      %p90 = scmp.ne.s32.totalorder %s73, %s89
      %p91 = scmp.eq.s32.totalorder %s18, 0
      %p92 = por %p90, %p91
      %p93 = scmp.le.s32.totalorder 1, %s12
      %p94 = scmp.lt.s32.totalorder %s12, 5
      %p95 = pnand %p93, %p94
      %p96 = pneg %p95
      // Predicated region
      $region9: #{cluster_gt_forward.1} parent=5 // pred_check
        _
      $region10: #{cluster_gt_forward.1} parent=5 // pred_check_branch
        %98 = sbr.rel (%p95) target = $region12
      $region11: #{cluster_gt_forward.1} parent=5 // pred_region
        %s99 = ssub.s32 %s12, 1
        // Predicated region
        $region13: #{cluster_gt_forward.1} parent=11 // pred_check
          %p100 = pneg %p59
        $region14: #{cluster_gt_forward.1} parent=11 // pred_check_branch
          %102 = sbr.rel (%p100) target = $region16
        $region15: #{cluster_gt_forward.1} parent=11 // pred_region
          %s104 = ssub.s32 2560, 2560
          %105 = vsyncadd [#allocation5], %s104
          %s106 = sshll.u32 [#allocation4], 4
          %s107 = int_to_ptr.vmem [resolvable:$true] %s106
          %112 = dma.hbm_to_vmem [thread:$0]  %s1, 2560, %s107, [#allocation5], 128, 128, 8
        $region16: #{cluster_gt_forward.1} parent=11 // pred_fallthru
          _
      $region12: #{cluster_gt_forward.1} parent=5 // pred_fallthru
        _
      %p113 = scmp.lt.s32.totalorder %s12, 4
      // Predicated region
      $region17: #{cluster_gt_forward.1} parent=5 // pred_check
        %p114 = pneg %p113
      $region18: #{cluster_gt_forward.1} parent=5 // pred_check_branch
        %116 = sbr.rel (%p114) target = $region20
      $region19: #{cluster_gt_forward.1} parent=5 // pred_region
        // Predicated region
        $region21: #{cluster_gt_forward.1} parent=19 // pred_check
          %p117 = pneg %p32
        $region22: #{cluster_gt_forward.1} parent=19 // pred_check_branch
          %119 = sbr.rel (%p117) target = $region24
        $region23: #{cluster_gt_forward.1} parent=19 // pred_region
          %s120 = sand.u32 %s22, 1
          %s121 = scalar_lea.sflag [#allocation3], %s120
          %s122 = sand.u32 %s22, 1
          %s123 = smul.addr %s122, 112
          %s124 = scalar_lea.vmem [#allocation2], %s123
          %s125 = smul.u32 14, %s12
          %s127 = ssub.s32 1792, 1792
          %128 = vsyncadd %s121, %s127
          %s129 = smul.addr %s125, 128
          %s130 = scalar_lea.hbm %s0, %s129
          %s131 = sshll.u32 %s124, 4
          %s132 = int_to_ptr.vmem [resolvable:$true] %s131
          %137 = dma.hbm_to_vmem [thread:$0]  %s130, 1792, %s132, %s121, 128, 128, 8
        $region24: #{cluster_gt_forward.1} parent=19 // pred_fallthru
          _
      $region20: #{cluster_gt_forward.1} parent=5 // pred_fallthru
        _
      %p138 = scmp.le.s32.totalorder 1, %s12
      %p139 = scmp.lt.s32.totalorder %s12, 5
      %p140 = pnand %p138, %p139
      %p141 = pneg %p140
      // Predicated region
      $region25: #{cluster_gt_forward.1} parent=5 // pred_check
        _
      $region26: #{cluster_gt_forward.1} parent=5 // pred_check_branch
        %143 = sbr.rel (%p140) target = $region28
      $region27: #{cluster_gt_forward.1} parent=5 // pred_region
        %s144 = ssub.s32 %s12, 1
        %s145 = sand.u32 %s25, 1
        %s146 = scalar_lea.sflag [#allocation3], %s145
        %s147 = sand.u32 %s25, 1
        %s148 = smul.addr %s147, 112
        %s149 = scalar_lea.vmem [#allocation2], %s148
        // Predicated region
        $region29: #{cluster_gt_forward.1} parent=27 // pred_check
          %p150 = pneg %p38
        $region30: #{cluster_gt_forward.1} parent=27 // pred_check_branch
          %152 = sbr.rel (%p150) target = $region32
        $region31: #{cluster_gt_forward.1} parent=27 // pred_region
          %153 = dma.done %s146, 1792
        $region32: #{cluster_gt_forward.1} parent=27 // pred_fallthru
          _
        // Predicated region
        $region33: #{cluster_gt_forward.1} parent=27 // pred_check
          %p154 = pneg %p59
        $region34: #{cluster_gt_forward.1} parent=27 // pred_check_branch
          %156 = sbr.rel (%p154) target = $region36
        $region35: #{cluster_gt_forward.1} parent=27 // pred_region
          %157 = dma.done [#allocation5], 2560
        $region36: #{cluster_gt_forward.1} parent=27 // pred_fallthru
          _
        %s158 = sand.u32 %s25, 1
        %s159 = scalar_lea.sflag [#allocation3], %s158
        %s160 = sand.u32 %s25, 1
        %s161 = smul.addr %s160, 112
        %s162 = scalar_lea.vmem [#allocation2], %s161
        %p163 = pneg %p38
        %p164 = pneg %p35
        %p165 = pneg %p59
        %p166 = pneg %p56
        %p167 = pneg %p85
        %p168 = pneg %p82
        %p169 = scmp.lt.s32.totalorder %s17, 3
        %s170 = scalar_select %p169, %s17, 3
        %s171 = smul.addr %s170, 8
        %s172 = scalar_lea.vmem %s2, %s171
        %s173 = smul.u32 14, %s17
        %p174 = scmp.lt.s32.totalorder %s17, 3
        %s175 = scalar_select %p174, %s17, 3
        %s176 = smul.addr %s175, 8
        %s177 = scalar_lea.vmem %s2, %s176
        %v179 = vld [vmem:[#allocation4] sm:$0xff]
        %v180 = vld [vmem:[#allocation4 + $0x8] sm:$0xff]
        %v181 = vld [vmem:[#allocation4 + $0x10] sm:$0xff]
        %v182 = vld [vmem:[#allocation4 + $0x18] sm:$0xff]
        %v183 = vld [vmem:[#allocation4 + $0x20] sm:$0xff]
        %v184 = vld [vmem:[#allocation4 + $0x28] sm:$0xff]
        %v185 = vld [vmem:[#allocation4 + $0x30] sm:$0xff]
        %v186 = vld [vmem:[#allocation4 + $0x38] sm:$0xff]
        %v187 = vld [vmem:[#allocation4 + $0x40] sm:$0xff]
        %v188 = vld [vmem:[#allocation4 + $0x48] sm:$0xff]
        %v189 = vld [vmem:[#allocation4 + $0x50] sm:$0xff]
        %v190 = vld [vmem:[#allocation4 + $0x58] sm:$0xff]
        %v191 = vld [vmem:[#allocation4 + $0x60] sm:$0xff]
        %v192 = vld [vmem:[#allocation4 + $0x68] sm:$0xff]
        %v193 = vld [vmem:[#allocation4 + $0x70] sm:$0xff]
        %v194 = vld [vmem:[#allocation4 + $0x78] sm:$0xff]
        %v195 = vld [vmem:[#allocation4 + $0x80] sm:$0xff]
        %v196 = vld [vmem:[#allocation4 + $0x88] sm:$0xff]
        %v197 = vld [vmem:[#allocation4 + $0x90] sm:$0xff]
        %v198 = vld [vmem:[#allocation4 + $0x98] sm:$0xff]
        %v199 = vld [vmem:[%s149] sm:$0xff]
        %v200 = vld [vmem:[%s149 + $0x8] sm:$0xff]
        %v201 = vld [vmem:[%s149 + $0x10] sm:$0xff]
        %v202 = vld [vmem:[%s149 + $0x18] sm:$0xff]
        %v203 = vld [vmem:[%s149 + $0x20] sm:$0x1]
        %v204 = vcvt.f32.s32.to.zero.pseudo %v203
        %v205 = vld [vmem:[%s149 + $0x21] sm:$0x1]
        %v206 = vcvt.f32.s32.to.zero.pseudo %v205
        %v207 = vld [vmem:[%s149 + $0x22] sm:$0x1]
        %v208 = vcvt.f32.s32.to.zero.pseudo %v207
        %v209 = vld [vmem:[%s149 + $0x28] sm:$0x3]
        %v210 = vld [vmem:[%s149 + $0x30] sm:$0xff]
        %v211 = vld [vmem:[%s149 + $0x38] sm:$0xff]
        %v212 = vld [vmem:[%s149 + $0x40] sm:$0xff]
        %v213 = vld [vmem:[%s149 + $0x48] sm:$0xff]
        %v214 = vld [vmem:[%s149 + $0x50] sm:$0xff]
        %v215 = vld [vmem:[%s149 + $0x58] sm:$0xff]
        %v216 = vld [vmem:[%s149 + $0x60] sm:$0xff]
        %v217 = vld [vmem:[%s149 + $0x68] sm:$0xff]
        %v218 = vcvt.f32.s32.to.zero.pseudo %v210
        %v219 = vcvt.f32.s32.to.zero.pseudo %v211
        %v220 = vcvt.f32.s32.to.zero.pseudo %v212
        %v221 = vcvt.f32.s32.to.zero.pseudo %v213
        %v222 = vcvt.f32.s32.to.zero.pseudo %v214
        %v223 = vcvt.f32.s32.to.zero.pseudo %v215
        %v224 = vcvt.f32.s32.to.zero.pseudo %v216
        %v225 = vcvt.f32.s32.to.zero.pseudo %v217
        %v226 = vlaneseq
        %v227 = vshrl.u32 %v226, 7
        %v228 = vadd.s32 %v227, 8
        %v229 = vadd.s32 %v227, 16
        %v230 = vadd.s32 %v227, 24
        %v231 = vlaneseq
        %v232 = vshrl.u32 %v231, 7
        %v233 = vsub.s32 0, %v232
        %v234 = vrot.slane %v204, %v233
        %vm235 = vcmp.eq.s32.totalorder %v227, %v234
        %vm236 = vcmp.eq.s32.totalorder %v228, %v234
        %vm237 = vcmp.eq.s32.totalorder %v229, %v234
        %vm238 = vcmp.eq.s32.totalorder %v230, %v234
        %v239 = vlaneseq
        %v240 = vshrl.u32 %v239, 7
        %v241 = vsub.s32 0, %v240
        %v242 = vrot.slane %v206, %v241
        %vm243 = vcmp.eq.s32.totalorder %v227, %v242
        %vm244 = vcmp.eq.s32.totalorder %v228, %v242
        %v245 = vsel %vm243, 1, 0
        %v246 = vsel %vm244, 1, 0
        %v247 = vcvt.s32.f32 %v245
        %v248 = vcvt.s32.f32 %v246
        %v249 = vlaneseq
        %v250 = vshrl.u32 %v249, 7
        %v251 = vsub.s32 0, %v250
        %v252 = vrot.slane %v208, %v251
        %vm253 = vcmp.eq.s32.totalorder %v227, %v252
        %vm254 = vcmp.eq.s32.totalorder %v228, %v252
        %255 = vset.pattern.permute.xlu0 0
        %256 = vperm.xlu0 %255, %v218
        %v257 = vpop.permute.xlu0 %256
        %258 = vset.pattern.permute.xlu0 0
        %259 = vperm.xlu0 %258, %v219
        %v260 = vpop.permute.xlu0 %259
        %261 = vset.pattern.permute.xlu0 0
        %262 = vperm.xlu0 %261, %v220
        %v263 = vpop.permute.xlu0 %262
        %264 = vset.pattern.permute.xlu0 0
        %265 = vperm.xlu0 %264, %v221
        %v266 = vpop.permute.xlu0 %265
        %267 = vset.pattern.permute.xlu0 0
        %268 = vperm.xlu0 %267, %v222
        %v269 = vpop.permute.xlu0 %268
        %270 = vset.pattern.permute.xlu0 0
        %271 = vperm.xlu0 %270, %v223
        %v272 = vpop.permute.xlu0 %271
        %273 = vset.pattern.permute.xlu0 0
        %274 = vperm.xlu0 %273, %v224
        %v275 = vpop.permute.xlu0 %274
        %276 = vset.pattern.permute.xlu0 0
        %277 = vperm.xlu0 %276, %v225
        %v278 = vpop.permute.xlu0 %277
        %vm279 = vcmp.eq.s32.totalorder %v257, %v242
        %vm280 = vcmp.eq.s32.totalorder %v260, %v242
        %vm281 = vcmp.eq.s32.totalorder %v263, %v242
        %vm282 = vcmp.eq.s32.totalorder %v266, %v242
        %vm283 = vcmp.eq.s32.totalorder %v269, %v242
        %vm284 = vcmp.eq.s32.totalorder %v272, %v242
        %vm285 = vcmp.eq.s32.totalorder %v275, %v242
        %vm286 = vcmp.eq.s32.totalorder %v278, %v242
        %vm287 = vcmask 392192
        %v288 = vsel %vm287, %v247, 0.0
        %289 = vadd.xlane.f32.xlu0 %v288
        %v290 = vpop.xlane.xlu0 %289
        %v291 = vsel %vm287, %v248, 0.0
        %292 = vadd.xlane.f32.xlu0 %v291
        %v293 = vpop.xlane.xlu0 %292
        %v294 = vmax.f32 %v290, 1.0
        %v295 = vmax.f32 %v293, 1.0
        %v296 = vrcp.pop %v294
        %v297 = vrcp.pop %v295
        %v298 = vpack.c.bf16 %v200, %v199
        %v299 = vpack.c.bf16 %v202, %v201
        %v300 = vpack.c.bf16 %v179, %v179
        %v301 = vlaneseq
        %v302 = vshrl.u32 %v301, 7
        %v303 = vsub.s32 0, %v302
        %v304 = vrot.slane %v198, %v303
        %vm305 = vcmask 64512
        %v307 = vsel %vm305, %v298, 0
        %v310 = vsel %vm305, %v299, 0
        %vm312 = vcmask 1043456
        %v314 = vsel %vm312, %v300, 0
        %316 = vmatprep.subr.bf16.mxu0 0
        %317 = vmatpush1.bf16.msra.mxu0 %v314
        %318 = vmatprep.subr.bf16.mxu0 0
        %319 = vmatpush1.bf16.msra.mxu0 0
        %320 = vmatprep.subr.bf16.mxu0 0
        %321 = vmatpush1.bf16.msra.mxu0 0
        %322 = vmatprep.subr.bf16.mxu0 0
        %323 = vmatpush1.bf16.msra.mxu0 0
        %324 = vmatprep.subr.bf16.mxu0 0
        %325 = vmatpush1.bf16.msra.mxu0 0
        %326 = vmatprep.subr.bf16.mxu0 0
        %327 = vmatpush1.bf16.msra.mxu0 0
        %328 = vmatprep.subr.bf16.mxu0 0
        %329 = vmatpush1.bf16.msra.mxu0 0
        %330 = vmatprep.subr.bf16.mxu0 0
        %331 = vmatpush1.bf16.msra.mxu0 0
        %332 = vmatprep.subr.bf16.mxu0 0
        %333 = vmatpush1.bf16.msra.mxu0 0
        %334 = vmatprep.subr.bf16.mxu0 0
        %335 = vmatpush1.bf16.msra.mxu0 0
        %336 = vmatprep.subr.bf16.mxu0 0
        %337 = vmatpush1.bf16.msra.mxu0 0
        %338 = vmatprep.subr.bf16.mxu0 0
        %339 = vmatpush1.bf16.msra.mxu0 0
        %340 = vmatprep.subr.bf16.mxu0 0
        %341 = vmatpush1.bf16.msra.mxu0 0
        %342 = vmatprep.subr.bf16.mxu0 0
        %343 = vmatpush1.bf16.msra.mxu0 0
        %344 = vmatprep.subr.bf16.mxu0 0
        %345 = vmatpush1.bf16.msra.mxu0 0
        %346 = vmatprep.subr.bf16.mxu0 0
        %347 = vmatpush1.bf16.msra.mxu0 0
        %348 = vmatprep.mubr.bf16.mxu0 0
        %349 = vmatmul.mubr.bf16.gmra.mrb[0].mxu0 %v307
        %v350 = vpop.f32.mrb[0].mxu0
        %v351 = vadd.f32 %v304, %v350
        %v352 = vpop.f32.mrb[0].mxu0
        %v353 = vpop.f32.mrb[0].mxu0
        %v354 = vadd.f32 %v304, %v353
        %v355 = vpop.f32.mrb[0].mxu0
        %356 = vmatprep.mubr.bf16.mxu0 0
        %357 = vmatmul.mubr.bf16.gmra.mrb[0].mxu0 %v310
        %v358 = vpop.f32.mrb[0].mxu0
        %v359 = vadd.f32 %v304, %v358
        %v360 = vpop.f32.mrb[0].mxu0
        %v361 = vpop.f32.mrb[0].mxu0
        %v362 = vadd.f32 %v304, %v361
        %v363 = vpop.f32.mrb[0].mxu0
        %364 = vdwg.mxu0
        %v365 = vmax.f32 %v351, 0.0
        %v366 = vmax.f32 %v354, 0.0
        %v367 = vmax.f32 %v359, 0.0
        %v368 = vmax.f32 %v362, 0.0
        %v369 = vpack.c.bf16 %v366, %v365
        %v370 = vpack.c.bf16 %v368, %v367
        %v371 = vpack.c.bf16 %v181, %v180
        %v372 = vpack.c.bf16 %v183, %v182
        %v373 = vlaneseq
        %v374 = vshrl.u32 %v373, 7
        %v375 = vsub.s32 1, %v374
        %v376 = vrot.slane %v198, %v375
        %vm377 = vcmask 261120
        %v379 = vsel %vm377, %v369, 0
        %v382 = vsel %vm377, %v370, 0
        %384 = vmatprep.subr.bf16.mxu0 0
        %385 = vmatpush1.bf16.msra.mxu0 %v371
        %386 = vmatprep.subr.bf16.mxu0 0
        %387 = vmatpush1.bf16.msra.mxu0 %v372
        %388 = vmatprep.subr.bf16.mxu0 0
        %389 = vmatpush1.bf16.msra.mxu0 0
        %390 = vmatprep.subr.bf16.mxu0 0
        %391 = vmatpush1.bf16.msra.mxu0 0
        %392 = vmatprep.subr.bf16.mxu0 0
        %393 = vmatpush1.bf16.msra.mxu0 0
        %394 = vmatprep.subr.bf16.mxu0 0
        %395 = vmatpush1.bf16.msra.mxu0 0
        %396 = vmatprep.subr.bf16.mxu0 0
        %397 = vmatpush1.bf16.msra.mxu0 0
        %398 = vmatprep.subr.bf16.mxu0 0
        %399 = vmatpush1.bf16.msra.mxu0 0
        %400 = vmatprep.subr.bf16.mxu0 0
        %401 = vmatpush1.bf16.msra.mxu0 0
        %402 = vmatprep.subr.bf16.mxu0 0
        %403 = vmatpush1.bf16.msra.mxu0 0
        %404 = vmatprep.subr.bf16.mxu0 0
        %405 = vmatpush1.bf16.msra.mxu0 0
        %406 = vmatprep.subr.bf16.mxu0 0
        %407 = vmatpush1.bf16.msra.mxu0 0
        %408 = vmatprep.subr.bf16.mxu0 0
        %409 = vmatpush1.bf16.msra.mxu0 0
        %410 = vmatprep.subr.bf16.mxu0 0
        %411 = vmatpush1.bf16.msra.mxu0 0
        %412 = vmatprep.subr.bf16.mxu0 0
        %413 = vmatpush1.bf16.msra.mxu0 0
        %414 = vmatprep.subr.bf16.mxu0 0
        %415 = vmatpush1.bf16.msra.mxu0 0
        %416 = vmatprep.mubr.bf16.mxu0 0
        %417 = vmatmul.mubr.bf16.gmra.mrb[0].mxu0 %v379
        %v418 = vpop.f32.mrb[0].mxu0
        %v419 = vadd.f32 %v376, %v418
        %v420 = vpop.f32.mrb[0].mxu0
        %v421 = vpop.f32.mrb[0].mxu0
        %v422 = vadd.f32 %v376, %v421
        %v423 = vpop.f32.mrb[0].mxu0
        %424 = vmatprep.mubr.bf16.mxu0 0
        %425 = vmatmul.mubr.bf16.gmra.mrb[0].mxu0 %v382
        %v426 = vpop.f32.mrb[0].mxu0
        %v427 = vadd.f32 %v376, %v426
        %v428 = vpop.f32.mrb[0].mxu0
        %v429 = vpop.f32.mrb[0].mxu0
        %v430 = vadd.f32 %v376, %v429
        %v431 = vpop.f32.mrb[0].mxu0
        %432 = vdwg.mxu0
        %v433 = vmax.f32 %v419, 0.0
        %v434 = vmax.f32 %v422, 0.0
        %v435 = vmax.f32 %v427, 0.0
        %v436 = vmax.f32 %v430, 0.0
        %v437 = vsel %vm235, 1, 0
        %v438 = vsel %vm236, 1, 0
        %v439 = vsel %vm237, 1, 0
        %v440 = vsel %vm238, 1, 0
        %v441 = vcvt.s32.f32 %v437
        %v442 = vcvt.s32.f32 %v438
        %v443 = vcvt.s32.f32 %v439
        %v444 = vcvt.s32.f32 %v440
        %v445 = vpack.c.bf16 %v442, %v441
        %v446 = vpack.c.bf16 %v444, %v443
        %v447 = vpack.c.bf16 %v434, %v433
        %v448 = vpack.c.bf16 %v436, %v435
        %449 = vxpose.xlu0.c.b16.start [1/8] %v445, 128
        %450 = vxpose.xlu0.c.b16.cont [2/8] %v446, 128
        %451 = vxpose.xlu0.c.b16.cont [3/8] 0, 128
        %452 = vxpose.xlu0.c.b16.cont [4/8] 0, 128
        %453 = vxpose.xlu0.c.b16.cont [5/8] 0, 128
        %454 = vxpose.xlu0.c.b16.cont [6/8] 0, 128
        %455 = vxpose.xlu0.c.b16.cont [7/8] 0, 128
        %456 = vxpose.xlu0.c.b16.end [8/8] 0, 128
        %v457 = vpop.trf.xlu0
        %v458 = vpop.trf.xlu0
        %v459 = vpop.trf.xlu0
        %v460 = vpop.trf.xlu0
        %v461 = vpop.trf.xlu0
        %v462 = vpop.trf.xlu0
        %v463 = vpop.trf.xlu0
        %v464 = vpop.trf.xlu0
        %v466 = vsel %vm377, %v457, 0
        %v469 = vsel %vm377, %v458, 0
        %v472 = vsel %vm377, %v459, 0
        %474 = vmatprep.subr.bf16.mxu0 0
        %475 = vmatpush1.bf16.msra.mxu0 %v447
        %476 = vmatprep.subr.bf16.mxu0 0
        %477 = vmatpush1.bf16.msra.mxu0 %v448
        %478 = vmatprep.subr.bf16.mxu0 0
        %479 = vmatpush1.bf16.msra.mxu0 0
        %480 = vmatprep.subr.bf16.mxu0 0
        %481 = vmatpush1.bf16.msra.mxu0 0
        %482 = vmatprep.subr.bf16.mxu0 0
        %483 = vmatpush1.bf16.msra.mxu0 0
        %484 = vmatprep.subr.bf16.mxu0 0
        %485 = vmatpush1.bf16.msra.mxu0 0
        %486 = vmatprep.subr.bf16.mxu0 0
        %487 = vmatpush1.bf16.msra.mxu0 0
        %488 = vmatprep.subr.bf16.mxu0 0
        %489 = vmatpush1.bf16.msra.mxu0 0
        %490 = vmatprep.subr.bf16.mxu0 0
        %491 = vmatpush1.bf16.msra.mxu0 0
        %492 = vmatprep.subr.bf16.mxu0 0
        %493 = vmatpush1.bf16.msra.mxu0 0
        %494 = vmatprep.subr.bf16.mxu0 0
        %495 = vmatpush1.bf16.msra.mxu0 0
        %496 = vmatprep.subr.bf16.mxu0 0
        %497 = vmatpush1.bf16.msra.mxu0 0
        %498 = vmatprep.subr.bf16.mxu0 0
        %499 = vmatpush1.bf16.msra.mxu0 0
        %500 = vmatprep.subr.bf16.mxu0 0
        %501 = vmatpush1.bf16.msra.mxu0 0
        %502 = vmatprep.subr.bf16.mxu0 0
        %503 = vmatpush1.bf16.msra.mxu0 0
        %504 = vmatprep.subr.bf16.mxu0 0
        %505 = vmatpush1.bf16.msra.mxu0 0
        %506 = vmatprep.mubr.bf16.mxu0 0
        %507 = vmatmul.mubr.bf16.gmra.mrb[0].mxu0 %v466
        %v508 = vpop.f32.mrb[0].mxu0
        %v509 = vadd.f32 0.0, %v508
        %v510 = vpop.f32.mrb[0].mxu0
        %v511 = vpop.f32.mrb[0].mxu0
        %v512 = vadd.f32 0.0, %v511
        %v513 = vpop.f32.mrb[0].mxu0
        %514 = vmatprep.mubr.bf16.mxu0 0
        %515 = vmatmul.mubr.bf16.gmra.mrb[0].mxu0 %v469
        %v516 = vpop.f32.mrb[0].mxu0
        %v517 = vadd.f32 0.0, %v516
        %v518 = vpop.f32.mrb[0].mxu0
        %v519 = vpop.f32.mrb[0].mxu0
        %v520 = vadd.f32 0.0, %v519
        %v521 = vpop.f32.mrb[0].mxu0
        %522 = vmatprep.mubr.bf16.mxu0 0
        %523 = vmatmul.mubr.bf16.gmra.mrb[0].mxu0 %v472
        %v524 = vpop.f32.mrb[0].mxu0
        %v525 = vadd.f32 0.0, %v524
        %v526 = vpop.f32.mrb[0].mxu0
        %v527 = vpop.f32.mrb[0].mxu0
        %v528 = vadd.f32 0.0, %v527
        %v529 = vpop.f32.mrb[0].mxu0
        %530 = vdwg.mxu0
        %v531 = vpack.c.bf16 %v512, %v509
        %v532 = vpack.c.bf16 %v520, %v517
        %v533 = vpack.c.bf16 %v528, %v525
        %v534 = vpack.c.bf16 %v185, %v184
        %v535 = vpack.c.bf16 %v187, %v186
        %v536 = vlaneseq
        %v537 = vshrl.u32 %v536, 7
        %v538 = vsub.s32 2, %v537
        %v539 = vrot.slane %v198, %v538
        %v541 = vsel %vm377, %v531, 0
        %v544 = vsel %vm377, %v532, 0
        %v547 = vsel %vm377, %v533, 0
        %549 = vmatprep.subr.bf16.mxu0 0
        %550 = vmatpush1.bf16.msra.mxu0 %v534
        %551 = vmatprep.subr.bf16.mxu0 0
        %552 = vmatpush1.bf16.msra.mxu0 %v535
        %553 = vmatprep.subr.bf16.mxu0 0
        %554 = vmatpush1.bf16.msra.mxu0 0
        %555 = vmatprep.subr.bf16.mxu0 0
        %556 = vmatpush1.bf16.msra.mxu0 0
        %557 = vmatprep.subr.bf16.mxu0 0
        %558 = vmatpush1.bf16.msra.mxu0 0
        %559 = vmatprep.subr.bf16.mxu0 0
        %560 = vmatpush1.bf16.msra.mxu0 0
        %561 = vmatprep.subr.bf16.mxu0 0
        %562 = vmatpush1.bf16.msra.mxu0 0
        %563 = vmatprep.subr.bf16.mxu0 0
        %564 = vmatpush1.bf16.msra.mxu0 0
        %565 = vmatprep.subr.bf16.mxu0 0
        %566 = vmatpush1.bf16.msra.mxu0 0
        %567 = vmatprep.subr.bf16.mxu0 0
        %568 = vmatpush1.bf16.msra.mxu0 0
        %569 = vmatprep.subr.bf16.mxu0 0
        %570 = vmatpush1.bf16.msra.mxu0 0
        %571 = vmatprep.subr.bf16.mxu0 0
        %572 = vmatpush1.bf16.msra.mxu0 0
        %573 = vmatprep.subr.bf16.mxu0 0
        %574 = vmatpush1.bf16.msra.mxu0 0
        %575 = vmatprep.subr.bf16.mxu0 0
        %576 = vmatpush1.bf16.msra.mxu0 0
        %577 = vmatprep.subr.bf16.mxu0 0
        %578 = vmatpush1.bf16.msra.mxu0 0
        %579 = vmatprep.subr.bf16.mxu0 0
        %580 = vmatpush1.bf16.msra.mxu0 0
        %581 = vmatprep.mubr.bf16.mxu0 0
        %582 = vmatmul.mubr.bf16.gmra.mrb[0].mxu0 %v541
        %v583 = vpop.f32.mrb[0].mxu0
        %v584 = vadd.f32 %v539, %v583
        %v585 = vpop.f32.mrb[0].mxu0
        %v586 = vpop.f32.mrb[0].mxu0
        %v587 = vadd.f32 %v539, %v586
        %v588 = vpop.f32.mrb[0].mxu0
        %589 = vmatprep.mubr.bf16.mxu0 0
        %590 = vmatmul.mubr.bf16.gmra.mrb[0].mxu0 %v544
        %v591 = vpop.f32.mrb[0].mxu0
        %v592 = vadd.f32 %v539, %v591
        %v593 = vpop.f32.mrb[0].mxu0
        %v594 = vpop.f32.mrb[0].mxu0
        %v595 = vadd.f32 %v539, %v594
        %v596 = vpop.f32.mrb[0].mxu0
        %597 = vmatprep.mubr.bf16.mxu0 0
        %598 = vmatmul.mubr.bf16.gmra.mrb[0].mxu0 %v547
        %v599 = vpop.f32.mrb[0].mxu0
        %v600 = vadd.f32 %v539, %v599
        %v601 = vpop.f32.mrb[0].mxu0
        %v602 = vpop.f32.mrb[0].mxu0
        %v603 = vadd.f32 %v539, %v602
        %v604 = vpop.f32.mrb[0].mxu0
        %605 = vdwg.mxu0
        %v606 = vpack.c.bf16 %v248, %v247
        %v607 = vpack.c.bf16 %v587, %v584
        %v608 = vpack.c.bf16 %v595, %v592
        %v609 = vpack.c.bf16 %v603, %v600
        %v611 = vsel %vm287, %v606, 0
        %613 = vmatprep.subr.bf16.mxu0 0
        %614 = vmatpush1.bf16.msra.mxu0 %v607
        %615 = vmatprep.subr.bf16.mxu0 0
        %616 = vmatpush1.bf16.msra.mxu0 %v608
        %617 = vmatprep.subr.bf16.mxu0 0
        %618 = vmatpush1.bf16.msra.mxu0 %v609
        %619 = vmatprep.subr.bf16.mxu0 0
        %620 = vmatpush1.bf16.msra.mxu0 0
        %621 = vmatprep.subr.bf16.mxu0 0
        %622 = vmatpush1.bf16.msra.mxu0 0
        %623 = vmatprep.subr.bf16.mxu0 0
        %624 = vmatpush1.bf16.msra.mxu0 0
        %625 = vmatprep.subr.bf16.mxu0 0
        %626 = vmatpush1.bf16.msra.mxu0 0
        %627 = vmatprep.subr.bf16.mxu0 0
        %628 = vmatpush1.bf16.msra.mxu0 0
        %629 = vmatprep.subr.bf16.mxu0 0
        %630 = vmatpush1.bf16.msra.mxu0 0
        %631 = vmatprep.subr.bf16.mxu0 0
        %632 = vmatpush1.bf16.msra.mxu0 0
        %633 = vmatprep.subr.bf16.mxu0 0
        %634 = vmatpush1.bf16.msra.mxu0 0
        %635 = vmatprep.subr.bf16.mxu0 0
        %636 = vmatpush1.bf16.msra.mxu0 0
        %637 = vmatprep.subr.bf16.mxu0 0
        %638 = vmatpush1.bf16.msra.mxu0 0
        %639 = vmatprep.subr.bf16.mxu0 0
        %640 = vmatpush1.bf16.msra.mxu0 0
        %641 = vmatprep.subr.bf16.mxu0 0
        %642 = vmatpush1.bf16.msra.mxu0 0
        %643 = vmatprep.subr.bf16.mxu0 0
        %644 = vmatpush1.bf16.msra.mxu0 0
        %645 = vmatprep.mubr.bf16.mxu0 0
        %646 = vmatmul.mubr.bf16.gmra.mrb[0].mxu0 %v611
        %v647 = vpop.f32.mrb[0].mxu0
        %v648 = vadd.f32 0.0, %v647
        %v649 = vpop.f32.mrb[0].mxu0
        %v650 = vpop.f32.mrb[0].mxu0
        %v651 = vadd.f32 0.0, %v650
        %v652 = vpop.f32.mrb[0].mxu0
        %653 = vdwg.mxu0
        %v654 = vmul.f32 %v648, %v296
        %v655 = vmul.f32 %v651, %v297
        %v656 = vpack.c.bf16 %v651, %v648
        %v657 = vpack.c.bf16 %v189, %v188
        %v658 = vpack.c.bf16 %v191, %v190
        %v659 = vlaneseq
        %v660 = vshrl.u32 %v659, 7
        %v661 = vsub.s32 3, %v660
        %v662 = vrot.slane %v198, %v661
        %v664 = vsel %vm377, %v656, 0
        %666 = vmatprep.subr.bf16.mxu0 0
        %667 = vmatpush1.bf16.msra.mxu0 %v657
        %668 = vmatprep.subr.bf16.mxu0 0
        %669 = vmatpush1.bf16.msra.mxu0 %v658
        %670 = vmatprep.subr.bf16.mxu0 0
        %671 = vmatpush1.bf16.msra.mxu0 0
        %672 = vmatprep.subr.bf16.mxu0 0
        %673 = vmatpush1.bf16.msra.mxu0 0
        %674 = vmatprep.subr.bf16.mxu0 0
        %675 = vmatpush1.bf16.msra.mxu0 0
        %676 = vmatprep.subr.bf16.mxu0 0
        %677 = vmatpush1.bf16.msra.mxu0 0
        %678 = vmatprep.subr.bf16.mxu0 0
        %679 = vmatpush1.bf16.msra.mxu0 0
        %680 = vmatprep.subr.bf16.mxu0 0
        %681 = vmatpush1.bf16.msra.mxu0 0
        %682 = vmatprep.subr.bf16.mxu0 0
        %683 = vmatpush1.bf16.msra.mxu0 0
        %684 = vmatprep.subr.bf16.mxu0 0
        %685 = vmatpush1.bf16.msra.mxu0 0
        %686 = vmatprep.subr.bf16.mxu0 0
        %687 = vmatpush1.bf16.msra.mxu0 0
        %688 = vmatprep.subr.bf16.mxu0 0
        %689 = vmatpush1.bf16.msra.mxu0 0
        %690 = vmatprep.subr.bf16.mxu0 0
        %691 = vmatpush1.bf16.msra.mxu0 0
        %692 = vmatprep.subr.bf16.mxu0 0
        %693 = vmatpush1.bf16.msra.mxu0 0
        %694 = vmatprep.subr.bf16.mxu0 0
        %695 = vmatpush1.bf16.msra.mxu0 0
        %696 = vmatprep.subr.bf16.mxu0 0
        %697 = vmatpush1.bf16.msra.mxu0 0
        %698 = vmatprep.mubr.bf16.mxu0 0
        %699 = vmatmul.mubr.bf16.gmra.mrb[0].mxu0 %v664
        %v700 = vpop.f32.mrb[0].mxu0
        %v701 = vadd.f32 %v662, %v700
        %v702 = vpop.f32.mrb[0].mxu0
        %v703 = vpop.f32.mrb[0].mxu0
        %v704 = vadd.f32 %v662, %v703
        %v705 = vpop.f32.mrb[0].mxu0
        %706 = vdwg.mxu0
        %v707 = vmax.f32 %v701, 0.0
        %v708 = vmax.f32 %v704, 0.0
        %v709 = vmax.f32 %v584, 0.0
        %v710 = vmax.f32 %v587, 0.0
        %v711 = vmax.f32 %v592, 0.0
        %v712 = vmax.f32 %v595, 0.0
        %v713 = vmax.f32 %v600, 0.0
        %v714 = vmax.f32 %v603, 0.0
        %v715 = vmax.f32 %v654, 0.0
        %v716 = vmax.f32 %v655, 0.0
        %v717 = vpack.c.bf16 %v716, %v715
        %718 = vxpose.xlu0.c.b16.start [1/8] %v606, 128
        %719 = vxpose.xlu0.c.b16.cont [2/8] 0, 128
        %720 = vxpose.xlu0.c.b16.cont [3/8] 0, 128
        %721 = vxpose.xlu0.c.b16.cont [4/8] 0, 128
        %722 = vxpose.xlu0.c.b16.cont [5/8] 0, 128
        %723 = vxpose.xlu0.c.b16.cont [6/8] 0, 128
        %724 = vxpose.xlu0.c.b16.cont [7/8] 0, 128
        %725 = vxpose.xlu0.c.b16.end [8/8] 0, 128
        %v726 = vpop.trf.xlu0
        %v727 = vpop.trf.xlu0
        %v728 = vpop.trf.xlu0
        %v729 = vpop.trf.xlu0
        %v730 = vpop.trf.xlu0
        %v731 = vpop.trf.xlu0
        %v732 = vpop.trf.xlu0
        %v733 = vpop.trf.xlu0
        %735 = vrot.lane.b32.xlu0 %v717, 96
        %v736 = vpop.permute.xlu0 %735
        %vm738 = vcmask 130048
        %v740 = vsel %vm738, %v726, 0
        %v743 = vsel %vm738, %v727, 0
        %v746 = vsel %vm738, %v728, 0
        %748 = vmatprep.subr.bf16.mxu0 0
        %749 = vmatpush1.bf16.msra.mxu0 %v736
        %750 = vmatprep.subr.bf16.mxu0 0
        %751 = vmatpush1.bf16.msra.mxu0 0
        %752 = vmatprep.subr.bf16.mxu0 0
        %753 = vmatpush1.bf16.msra.mxu0 0
        %754 = vmatprep.subr.bf16.mxu0 0
        %755 = vmatpush1.bf16.msra.mxu0 0
        %756 = vmatprep.subr.bf16.mxu0 0
        %757 = vmatpush1.bf16.msra.mxu0 0
        %758 = vmatprep.subr.bf16.mxu0 0
        %759 = vmatpush1.bf16.msra.mxu0 0
        %760 = vmatprep.subr.bf16.mxu0 0
        %761 = vmatpush1.bf16.msra.mxu0 0
        %762 = vmatprep.subr.bf16.mxu0 0
        %763 = vmatpush1.bf16.msra.mxu0 0
        %764 = vmatprep.subr.bf16.mxu0 0
        %765 = vmatpush1.bf16.msra.mxu0 0
        %766 = vmatprep.subr.bf16.mxu0 0
        %767 = vmatpush1.bf16.msra.mxu0 0
        %768 = vmatprep.subr.bf16.mxu0 0
        %769 = vmatpush1.bf16.msra.mxu0 0
        %770 = vmatprep.subr.bf16.mxu0 0
        %771 = vmatpush1.bf16.msra.mxu0 0
        %772 = vmatprep.subr.bf16.mxu0 0
        %773 = vmatpush1.bf16.msra.mxu0 0
        %774 = vmatprep.subr.bf16.mxu0 0
        %775 = vmatpush1.bf16.msra.mxu0 0
        %776 = vmatprep.subr.bf16.mxu0 0
        %777 = vmatpush1.bf16.msra.mxu0 0
        %778 = vmatprep.subr.bf16.mxu0 0
        %779 = vmatpush1.bf16.msra.mxu0 0
        %780 = vmatprep.mubr.bf16.mxu0 0
        %781 = vmatmul.mubr.bf16.gmra.mrb[0].mxu0 %v740
        %v782 = vpop.f32.mrb[0].mxu0
        %v783 = vadd.f32 0.0, %v782
        %v784 = vpop.f32.mrb[0].mxu0
        %v785 = vpop.f32.mrb[0].mxu0
        %v786 = vadd.f32 0.0, %v785
        %v787 = vpop.f32.mrb[0].mxu0
        %788 = vmatprep.mubr.bf16.mxu0 0
        %789 = vmatmul.mubr.bf16.gmra.mrb[0].mxu0 %v743
        %v790 = vpop.f32.mrb[0].mxu0
        %v791 = vadd.f32 0.0, %v790
        %v792 = vpop.f32.mrb[0].mxu0
        %v793 = vpop.f32.mrb[0].mxu0
        %v794 = vadd.f32 0.0, %v793
        %v795 = vpop.f32.mrb[0].mxu0
        %796 = vmatprep.mubr.bf16.mxu0 0
        %797 = vmatmul.mubr.bf16.gmra.mrb[0].mxu0 %v746
        %v798 = vpop.f32.mrb[0].mxu0
        %v799 = vadd.f32 0.0, %v798
        %v800 = vpop.f32.mrb[0].mxu0
        %v801 = vpop.f32.mrb[0].mxu0
        %v802 = vadd.f32 0.0, %v801
        %v803 = vpop.f32.mrb[0].mxu0
        %804 = vdwg.mxu0
        %v806 = vrot.slane %v198, 6
        %s807 = vtos %v806
        %v808 = vstv %s807
        %v810 = vmul.f32 %v808, %v783
        %v811 = vmul.f32 %v808, %v786
        %v812 = vmul.f32 %v808, %v791
        %v813 = vmul.f32 %v808, %v794
        %v814 = vmul.f32 %v808, %v799
        %v815 = vmul.f32 %v808, %v802
        %816 = vrot.lane.b32.xlu0 %v806, 127
        %v817 = vpop.permute.xlu0 %816
        %s818 = vtos %v817
        %v819 = vstv %s818
        %v821 = vmul.f32 %v819, %v709
        %v822 = vmul.f32 %v819, %v710
        %v823 = vmul.f32 %v819, %v711
        %v824 = vmul.f32 %v819, %v712
        %v825 = vmul.f32 %v819, %v713
        %v826 = vmul.f32 %v819, %v714
        %833 = vrot.lane.b32.xlu0 %v821, 96
        %v834 = vpop.permute.xlu0 %833
        %835 = vrot.lane.b32.xlu0 %v822, 96
        %v836 = vpop.permute.xlu0 %835
        %837 = vrot.lane.b32.xlu0 %v823, 96
        %v838 = vpop.permute.xlu0 %837
        %839 = vrot.lane.b32.xlu0 %v824, 96
        %v840 = vpop.permute.xlu0 %839
        %841 = vrot.lane.b32.xlu0 %v825, 96
        %v842 = vpop.permute.xlu0 %841
        %843 = vrot.lane.b32.xlu0 %v826, 96
        %v844 = vpop.permute.xlu0 %843
        %v851 = vadd.f32 %v810, %v834
        %v852 = vadd.f32 %v811, %v836
        %v853 = vadd.f32 %v812, %v838
        %v854 = vadd.f32 %v813, %v840
        %v855 = vadd.f32 %v814, %v842
        %v856 = vadd.f32 %v815, %v844
        %v857 = vpack.c.bf16 %v708, %v707
        %v858 = vpack.c.bf16 %v852, %v851
        %v859 = vpack.c.bf16 %v854, %v853
        %v860 = vpack.c.bf16 %v856, %v855
        %v862 = vsel %vm377, %v857, 0
        %v865 = vsel %vm377, %v858, 0
        %v868 = vsel %vm377, %v859, 0
        %v871 = vsel %vm377, %v860, 0
        %873 = vmatprep.subr.bf16.mxu0 0
        %874 = vmatpush1.bf16.xpose.msra.mxu0 %v865
        %875 = vmatprep.subr.bf16.mxu0 0
        %876 = vmatpush1.bf16.xpose.msra.mxu0 %v868
        %877 = vmatprep.subr.bf16.mxu0 0
        %878 = vmatpush1.bf16.xpose.msra.mxu0 %v871
        %879 = vmatprep.subr.bf16.mxu0 0
        %880 = vmatpush1.bf16.xpose.msra.mxu0 0
        %881 = vmatprep.subr.bf16.mxu0 0
        %882 = vmatpush1.bf16.xpose.msra.mxu0 0
        %883 = vmatprep.subr.bf16.mxu0 0
        %884 = vmatpush1.bf16.xpose.msra.mxu0 0
        %885 = vmatprep.subr.bf16.mxu0 0
        %886 = vmatpush1.bf16.xpose.msra.mxu0 0
        %887 = vmatprep.subr.bf16.mxu0 0
        %888 = vmatpush1.bf16.xpose.msra.mxu0 0
        %889 = vmatprep.subr.bf16.mxu0 0
        %890 = vmatpush1.bf16.xpose.msra.mxu0 0
        %891 = vmatprep.subr.bf16.mxu0 0
        %892 = vmatpush1.bf16.xpose.msra.mxu0 0
        %893 = vmatprep.subr.bf16.mxu0 0
        %894 = vmatpush1.bf16.xpose.msra.mxu0 0
        %895 = vmatprep.subr.bf16.mxu0 0
        %896 = vmatpush1.bf16.xpose.msra.mxu0 0
        %897 = vmatprep.subr.bf16.mxu0 0
        %898 = vmatpush1.bf16.xpose.msra.mxu0 0
        %899 = vmatprep.subr.bf16.mxu0 0
        %900 = vmatpush1.bf16.xpose.msra.mxu0 0
        %901 = vmatprep.subr.bf16.mxu0 0
        %902 = vmatpush1.bf16.xpose.msra.mxu0 0
        %903 = vmatprep.subr.bf16.mxu0 0
        %904 = vmatpush1.bf16.xpose.msra.mxu0 0
        %905 = vmatprep.mubr.bf16.mxu0 0
        %906 = vmatmul.mubr.bf16.gmra.mrb[0].mxu0 %v862
        %v907 = vpop.f32.mrb[0].mxu0
        %v908 = vadd.f32 0.0, %v907
        %v909 = vpop.f32.mrb[0].mxu0
        %v910 = vpop.f32.mrb[0].mxu0
        %v911 = vadd.f32 0.0, %v910
        %v912 = vpop.f32.mrb[0].mxu0
        %913 = vdwg.mxu0
        %v914 = vsel %vm253, 1, 0
        %v915 = vsel %vm254, 1, 0
        %v916 = vcvt.s32.f32 %v914
        %v917 = vcvt.s32.f32 %v915
        %v918 = vpack.c.bf16 %v917, %v916
        %v919 = vsel %vm279, 1, 0
        %v920 = vsel %vm280, 1, 0
        %v921 = vsel %vm281, 1, 0
        %v922 = vsel %vm282, 1, 0
        %v923 = vsel %vm283, 1, 0
        %v924 = vsel %vm284, 1, 0
        %v925 = vsel %vm285, 1, 0
        %v926 = vsel %vm286, 1, 0
        %v927 = vcvt.s32.f32 %v919
        %v928 = vcvt.s32.f32 %v920
        %v929 = vcvt.s32.f32 %v921
        %v930 = vcvt.s32.f32 %v922
        %v931 = vcvt.s32.f32 %v923
        %v932 = vcvt.s32.f32 %v924
        %v933 = vcvt.s32.f32 %v925
        %v934 = vcvt.s32.f32 %v926
        %v935 = vpack.c.bf16 %v928, %v927
        %v936 = vpack.c.bf16 %v930, %v929
        %v937 = vpack.c.bf16 %v932, %v931
        %v938 = vpack.c.bf16 %v934, %v933
        %vm939 = vcmask 523264
        %v941 = vsel %vm939, %v918, 0
        %943 = vmatprep.subr.bf16.mxu0 0
        %944 = vmatpush1.bf16.msra.mxu0 %v935
        %945 = vmatprep.subr.bf16.mxu0 0
        %946 = vmatpush1.bf16.msra.mxu0 %v936
        %947 = vmatprep.subr.bf16.mxu0 0
        %948 = vmatpush1.bf16.msra.mxu0 %v937
        %949 = vmatprep.subr.bf16.mxu0 0
        %950 = vmatpush1.bf16.msra.mxu0 %v938
        %951 = vmatprep.subr.bf16.mxu0 0
        %952 = vmatpush1.bf16.msra.mxu0 0
        %953 = vmatprep.subr.bf16.mxu0 0
        %954 = vmatpush1.bf16.msra.mxu0 0
        %955 = vmatprep.subr.bf16.mxu0 0
        %956 = vmatpush1.bf16.msra.mxu0 0
        %957 = vmatprep.subr.bf16.mxu0 0
        %958 = vmatpush1.bf16.msra.mxu0 0
        %959 = vmatprep.subr.bf16.mxu0 0
        %960 = vmatpush1.bf16.msra.mxu0 0
        %961 = vmatprep.subr.bf16.mxu0 0
        %962 = vmatpush1.bf16.msra.mxu0 0
        %963 = vmatprep.subr.bf16.mxu0 0
        %964 = vmatpush1.bf16.msra.mxu0 0
        %965 = vmatprep.subr.bf16.mxu0 0
        %966 = vmatpush1.bf16.msra.mxu0 0
        %967 = vmatprep.subr.bf16.mxu0 0
        %968 = vmatpush1.bf16.msra.mxu0 0
        %969 = vmatprep.subr.bf16.mxu0 0
        %970 = vmatpush1.bf16.msra.mxu0 0
        %971 = vmatprep.subr.bf16.mxu0 0
        %972 = vmatpush1.bf16.msra.mxu0 0
        %973 = vmatprep.subr.bf16.mxu0 0
        %974 = vmatpush1.bf16.msra.mxu0 0
        %975 = vmatprep.mubr.bf16.mxu0 0
        %976 = vmatmul.mubr.bf16.gmra.mrb[0].mxu0 %v941
        %v977 = vpop.f32.mrb[0].mxu0
        %v978 = vadd.f32 0.0, %v977
        %v979 = vpop.f32.mrb[0].mxu0
        %v980 = vpop.f32.mrb[0].mxu0
        %v981 = vadd.f32 0.0, %v980
        %v982 = vpop.f32.mrb[0].mxu0
        %983 = vdwg.mxu0
        %v984 = vmul.f32 %v978, %v908
        %v985 = vmul.f32 %v981, %v911
        %v986 = vpack.c.bf16 %v985, %v984
        %990 = vrot.lane.b32.xlu0 %v607, 32
        %v991 = vpop.permute.xlu0 %990
        %992 = vrot.lane.b32.xlu0 %v608, 32
        %v993 = vpop.permute.xlu0 %992
        %994 = vrot.lane.b32.xlu0 %v609, 32
        %v995 = vpop.permute.xlu0 %994
        %v1000 = vsel %vm287, %v986, 0
        %1002 = vmatprep.subr.bf16.mxu0 0
        %1003 = vmatpush1.bf16.msra.mxu0 %v991
        %1004 = vmatprep.subr.bf16.mxu0 0
        %1005 = vmatpush1.bf16.msra.mxu0 %v993
        %1006 = vmatprep.subr.bf16.mxu0 0
        %1007 = vmatpush1.bf16.msra.mxu0 %v995
        %1008 = vmatprep.subr.bf16.mxu0 0
        %1009 = vmatpush1.bf16.msra.mxu0 0
        %1010 = vmatprep.subr.bf16.mxu0 0
        %1011 = vmatpush1.bf16.msra.mxu0 0
        %1012 = vmatprep.subr.bf16.mxu0 0
        %1013 = vmatpush1.bf16.msra.mxu0 0
        %1014 = vmatprep.subr.bf16.mxu0 0
        %1015 = vmatpush1.bf16.msra.mxu0 0
        %1016 = vmatprep.subr.bf16.mxu0 0
        %1017 = vmatpush1.bf16.msra.mxu0 0
        %1018 = vmatprep.subr.bf16.mxu0 0
        %1019 = vmatpush1.bf16.msra.mxu0 0
        %1020 = vmatprep.subr.bf16.mxu0 0
        %1021 = vmatpush1.bf16.msra.mxu0 0
        %1022 = vmatprep.subr.bf16.mxu0 0
        %1023 = vmatpush1.bf16.msra.mxu0 0
        %1024 = vmatprep.subr.bf16.mxu0 0
        %1025 = vmatpush1.bf16.msra.mxu0 0
        %1026 = vmatprep.subr.bf16.mxu0 0
        %1027 = vmatpush1.bf16.msra.mxu0 0
        %1028 = vmatprep.subr.bf16.mxu0 0
        %1029 = vmatpush1.bf16.msra.mxu0 0
        %1030 = vmatprep.subr.bf16.mxu0 0
        %1031 = vmatpush1.bf16.msra.mxu0 0
        %1032 = vmatprep.subr.bf16.mxu0 0
        %1033 = vmatpush1.bf16.msra.mxu0 0
        %1034 = vmatprep.mubr.bf16.mxu0 0
        %1035 = vmatmul.mubr.bf16.gmra.mrb[0].mxu0 %v1000
        %v1036 = vpop.f32.mrb[0].mxu0
        %v1037 = vadd.f32 0.0, %v1036
        %v1038 = vpop.f32.mrb[0].mxu0
        %v1039 = vpop.f32.mrb[0].mxu0
        %v1040 = vadd.f32 0.0, %v1039
        %v1041 = vpop.f32.mrb[0].mxu0
        %1042 = vdwg.mxu0
        %v1043 = vsel %vm287, %v984, 0.0
        %1044 = vadd.xlane.f32.xlu0 %v1043
        %v1045 = vpop.xlane.xlu0 %1044
        %v1046 = vsel %vm287, %v985, 0.0
        %1047 = vadd.xlane.f32.xlu0 %v1046
        %v1048 = vpop.xlane.xlu0 %1047
        %v1049 = vadd.f32 %v1045, 1e-06
        %v1050 = vadd.f32 %v1048, 1e-06
        %v1051 = vrcp.pop %v1049
        %v1052 = vrcp.pop %v1050
        %v1053 = vmul.f32 %v1037, %v1051
        %v1054 = vmul.f32 %v1040, %v1052
        %1057 = vrot.lane.b32.xlu0 %v654, 64
        %v1058 = vpop.permute.xlu0 %1057
        %1059 = vrot.lane.b32.xlu0 %v655, 64
        %v1060 = vpop.permute.xlu0 %1059
        %v1063 = vadd.f32 %v1053, %v1058
        %v1064 = vadd.f32 %v1054, %v1060
        %v1065 = vpack.c.bf16 %v209, %v209
        %v1066 = vpack.c.bf16 %v1064, %v1063
        %v1068 = vsel %vm738, %v1065, 0
        %1070 = vmatprep.subr.bf16.mxu0 0
        %1071 = vmatpush1.bf16.msra.mxu0 %v1066
        %1072 = vmatprep.subr.bf16.mxu0 0
        %1073 = vmatpush1.bf16.msra.mxu0 0
        %1074 = vmatprep.subr.bf16.mxu0 0
        %1075 = vmatpush1.bf16.msra.mxu0 0
        %1076 = vmatprep.subr.bf16.mxu0 0
        %1077 = vmatpush1.bf16.msra.mxu0 0
        %1078 = vmatprep.subr.bf16.mxu0 0
        %1079 = vmatpush1.bf16.msra.mxu0 0
        %1080 = vmatprep.subr.bf16.mxu0 0
        %1081 = vmatpush1.bf16.msra.mxu0 0
        %1082 = vmatprep.subr.bf16.mxu0 0
        %1083 = vmatpush1.bf16.msra.mxu0 0
        %1084 = vmatprep.subr.bf16.mxu0 0
        %1085 = vmatpush1.bf16.msra.mxu0 0
        %1086 = vmatprep.subr.bf16.mxu0 0
        %1087 = vmatpush1.bf16.msra.mxu0 0
        %1088 = vmatprep.subr.bf16.mxu0 0
        %1089 = vmatpush1.bf16.msra.mxu0 0
        %1090 = vmatprep.subr.bf16.mxu0 0
        %1091 = vmatpush1.bf16.msra.mxu0 0
        %1092 = vmatprep.subr.bf16.mxu0 0
        %1093 = vmatpush1.bf16.msra.mxu0 0
        %1094 = vmatprep.subr.bf16.mxu0 0
        %1095 = vmatpush1.bf16.msra.mxu0 0
        %1096 = vmatprep.subr.bf16.mxu0 0
        %1097 = vmatpush1.bf16.msra.mxu0 0
        %1098 = vmatprep.subr.bf16.mxu0 0
        %1099 = vmatpush1.bf16.msra.mxu0 0
        %1100 = vmatprep.subr.bf16.mxu0 0
        %1101 = vmatpush1.bf16.msra.mxu0 0
        %1102 = vmatprep.mubr.bf16.mxu0 0
        %1103 = vmatmul.mubr.bf16.gmra.mrb[0].mxu0 %v1068
        %v1104 = vpop.f32.mrb[0].mxu0
        %v1105 = vadd.f32 0.0, %v1104
        %v1106 = vpop.f32.mrb[0].mxu0
        %v1107 = vpop.f32.mrb[0].mxu0
        %v1108 = vpop.f32.mrb[0].mxu0
        %1109 = vdwg.mxu0
        %v1110 = vpack.c.bf16 %v1105, %v1105
        %v1111 = vpack.c.bf16 %v193, %v192
        %v1112 = vpack.c.bf16 %v195, %v194
        %v1113 = vlaneseq
        %v1114 = vshrl.u32 %v1113, 7
        %v1115 = vsub.s32 4, %v1114
        %v1116 = vrot.slane %v198, %v1115
        %v1118 = vsel %vm377, %v1110, 0
        %1120 = vmatprep.subr.bf16.mxu0 0
        %1121 = vmatpush1.bf16.msra.mxu0 %v1111
        %1122 = vmatprep.subr.bf16.mxu0 0
        %1123 = vmatpush1.bf16.msra.mxu0 %v1112
        %1124 = vmatprep.subr.bf16.mxu0 0
        %1125 = vmatpush1.bf16.msra.mxu0 0
        %1126 = vmatprep.subr.bf16.mxu0 0
        %1127 = vmatpush1.bf16.msra.mxu0 0
        %1128 = vmatprep.subr.bf16.mxu0 0
        %1129 = vmatpush1.bf16.msra.mxu0 0
        %1130 = vmatprep.subr.bf16.mxu0 0
        %1131 = vmatpush1.bf16.msra.mxu0 0
        %1132 = vmatprep.subr.bf16.mxu0 0
        %1133 = vmatpush1.bf16.msra.mxu0 0
        %1134 = vmatprep.subr.bf16.mxu0 0
        %1135 = vmatpush1.bf16.msra.mxu0 0
        %1136 = vmatprep.subr.bf16.mxu0 0
        %1137 = vmatpush1.bf16.msra.mxu0 0
        %1138 = vmatprep.subr.bf16.mxu0 0
        %1139 = vmatpush1.bf16.msra.mxu0 0
        %1140 = vmatprep.subr.bf16.mxu0 0
        %1141 = vmatpush1.bf16.msra.mxu0 0
        %1142 = vmatprep.subr.bf16.mxu0 0
        %1143 = vmatpush1.bf16.msra.mxu0 0
        %1144 = vmatprep.subr.bf16.mxu0 0
        %1145 = vmatpush1.bf16.msra.mxu0 0
        %1146 = vmatprep.subr.bf16.mxu0 0
        %1147 = vmatpush1.bf16.msra.mxu0 0
        %1148 = vmatprep.subr.bf16.mxu0 0
        %1149 = vmatpush1.bf16.msra.mxu0 0
        %1150 = vmatprep.subr.bf16.mxu0 0
        %1151 = vmatpush1.bf16.msra.mxu0 0
        %1152 = vmatprep.mubr.bf16.mxu0 0
        %1153 = vmatmul.mubr.bf16.gmra.mrb[0].mxu0 %v1118
        %v1154 = vpop.f32.mrb[0].mxu0
        %v1155 = vadd.f32 %v1116, %v1154
        %v1156 = vpop.f32.mrb[0].mxu0
        %v1157 = vpop.f32.mrb[0].mxu0
        %v1158 = vpop.f32.mrb[0].mxu0
        %1159 = vdwg.mxu0
        %v1160 = vmax.f32 %v1155, 0.0
        %v1161 = vpack.c.bf16 %v1160, %v1160
        %v1162 = vpack.c.bf16 %v197, %v196
        %v1163 = vlaneseq
        %v1164 = vshrl.u32 %v1163, 7
        %v1165 = vsub.s32 5, %v1164
        %v1166 = vrot.slane %v198, %v1165
        %v1168 = vsel %vm738, %v1161, 0
        %1170 = vmatprep.subr.bf16.mxu0 0
        %1171 = vmatpush1.bf16.msra.mxu0 %v1162
        %1172 = vmatprep.subr.bf16.mxu0 0
        %1173 = vmatpush1.bf16.msra.mxu0 0
        %1174 = vmatprep.subr.bf16.mxu0 0
        %1175 = vmatpush1.bf16.msra.mxu0 0
        %1176 = vmatprep.subr.bf16.mxu0 0
        %1177 = vmatpush1.bf16.msra.mxu0 0
        %1178 = vmatprep.subr.bf16.mxu0 0
        %1179 = vmatpush1.bf16.msra.mxu0 0
        %1180 = vmatprep.subr.bf16.mxu0 0
        %1181 = vmatpush1.bf16.msra.mxu0 0
        %1182 = vmatprep.subr.bf16.mxu0 0
        %1183 = vmatpush1.bf16.msra.mxu0 0
        %1184 = vmatprep.subr.bf16.mxu0 0
        %1185 = vmatpush1.bf16.msra.mxu0 0
        %1186 = vmatprep.subr.bf16.mxu0 0
        %1187 = vmatpush1.bf16.msra.mxu0 0
        %1188 = vmatprep.subr.bf16.mxu0 0
        %1189 = vmatpush1.bf16.msra.mxu0 0
        %1190 = vmatprep.subr.bf16.mxu0 0
        %1191 = vmatpush1.bf16.msra.mxu0 0
        %1192 = vmatprep.subr.bf16.mxu0 0
        %1193 = vmatpush1.bf16.msra.mxu0 0
        %1194 = vmatprep.subr.bf16.mxu0 0
        %1195 = vmatpush1.bf16.msra.mxu0 0
        %1196 = vmatprep.subr.bf16.mxu0 0
        %1197 = vmatpush1.bf16.msra.mxu0 0
        %1198 = vmatprep.subr.bf16.mxu0 0
        %1199 = vmatpush1.bf16.msra.mxu0 0
        %1200 = vmatprep.subr.bf16.mxu0 0
        %1201 = vmatpush1.bf16.msra.mxu0 0
        %1202 = vmatprep.mubr.bf16.mxu0 0
        %1203 = vmatmul.mubr.bf16.gmra.mrb[0].mxu0 %v1168
        %v1204 = vpop.f32.mrb[0].mxu0
        %v1205 = vadd.f32 %v1166, %v1204
        %v1206 = vpop.f32.mrb[0].mxu0
        %v1207 = vpop.f32.mrb[0].mxu0
        %v1208 = vpop.f32.mrb[0].mxu0
        %1209 = vdwg.mxu0
        %vm1210 = vcmask 25600
        %v1211 = vsel %vm1210, %v1205, -inf
        %1212 = vmax.xlane.f32.xlu0 %v1211
        %v1213 = vpop.xlane.xlu0 %1212
        %v1214 = vsub.f32 %v1205, %v1213
        %v1215 = vmul.f32 %v1214, 1.442695
        %v1216 = vpow.pop %v1215
        %v1217 = vsel %vm1210, %v1216, 0.0
        %1218 = vadd.xlane.f32.xlu0 %v1217
        %v1219 = vpop.xlane.xlu0 %1218
        %v1220 = vlog2.pop %v1219
        %v1221 = vmul.f32 %v1220, 0.6931472
        %v1222 = vadd.f32 %v1213, %v1221
        %1223 = vst [vmem:[%s177] sm:$0xff] 0.0
        %v1224 = vsub.f32 %v1205, %v1222
        %1225 = vst.msk [vmem:[%s177] sm:$0x3] %vm1210, %v1224
        %p1226 = scmp.lt.s32.totalorder %s17, 3
        %s1227 = scalar_select %p1226, %s17, 3
        %s1228 = smul.addr %s1227, 8
        %s1229 = scalar_lea.vmem %s2, %s1228
        // Predicated region
        $region37: #{cluster_gt_forward.1} parent=27 // pred_check
          %p1230 = pneg %p82
        $region38: #{cluster_gt_forward.1} parent=27 // pred_check_branch
          %1232 = sbr.rel (%p1230) target = $region40
        $region39: #{cluster_gt_forward.1} parent=27 // pred_region
          _
        $region40: #{cluster_gt_forward.1} parent=27 // pred_fallthru
          _
      $region28: #{cluster_gt_forward.1} parent=5 // pred_fallthru
        _
      %p1233 = scmp.le.s32.totalorder 2, %s12
      // Predicated region
      $region41: #{cluster_gt_forward.1} parent=5 // pred_check
        %p1234 = pneg %p1233
      $region42: #{cluster_gt_forward.1} parent=5 // pred_check_branch
        %1236 = sbr.rel (%p1234) target = $region44
      $region43: #{cluster_gt_forward.1} parent=5 // pred_region
        %s1237 = ssub.s32 %s12, 2
        // Predicated region
        $region45: #{cluster_gt_forward.1} parent=43 // pred_check
          %p1238 = pneg %p88
        $region46: #{cluster_gt_forward.1} parent=43 // pred_check_branch
          %1240 = sbr.rel (%p1238) target = $region48
        $region47: #{cluster_gt_forward.1} parent=43 // pred_region
          %p1241 = scmp.lt.s32.totalorder %s18, 3
          %s1242 = scalar_select %p1241, %s18, 3
          %s1243 = smul.addr %s1242, 8
          %s1244 = scalar_lea.vmem %s2, %s1243
        $region48: #{cluster_gt_forward.1} parent=43 // pred_fallthru
          _
      $region44: #{cluster_gt_forward.1} parent=5 // pred_fallthru
        _
    $region6: #{cluster_gt_forward.1} parent=1 // loop_footer
      %s16 = sadd.s32 1, %s12
    $region7: #{cluster_gt_forward.1} parent=1 // loop_footer_branch
      %11 = sbr.rel target = $region3
    $region8: #{cluster_gt_forward.1} parent=1 // loop_exit
      _
    %1245 = vsyncpa [#allocation3], 1
    %s1246 = scalar_lea.sflag [#allocation3], 1
    %1247 = vsyncpa %s1246, 1
    %1248 = vsyncpa [#allocation5], 1

</llo_original>
